<compile_context>
chip_gen: v5e
topology: v5e:2x2
jax: 0.10.0
libtpu: 0.0.40
codegen_flags: <defaults>
</compile_context>

<pallas_src>
import functools

import jax
import jax.numpy as jnp
import numpy as np
from jax.experimental import pallas as pl
from jax.experimental.pallas import tpu as pltpu

_BN_EPS = 1e-5
_COMPUTE_DTYPE = jnp.bfloat16  # MXU operand dtype (f32 accumulation)


# ---------------------------------------------------------------------------
# Chip query (cached): VMEM capacity + v5e detection.
# ---------------------------------------------------------------------------
_CHIP_INFO = None


def _chip_info():
    global _CHIP_INFO
    if _CHIP_INFO is not None:
        return _CHIP_INFO
    vmem_cap = None
    try:
        info = pltpu.get_tpu_info()
        for name in ("vmem_capacity_bytes", "vmem_bytes", "vmem_size_bytes"):
            v = getattr(info, name, None)
            if isinstance(v, (int, np.integer)) and int(v) > 0:
                vmem_cap = int(v)
                break
    except Exception:
        vmem_cap = None
    if vmem_cap is None:
        vmem_cap = 64 * 1024 * 1024  # conservative: v7x per-TensorCore VMEM
    kind = ""
    try:
        kind = jax.devices()[0].device_kind.lower()
    except Exception:
        pass
    is_v5e = ("v5" in kind) and (("lite" in kind) or ("v5e" in kind))
    _CHIP_INFO = (vmem_cap, is_v5e)
    return _CHIP_INFO


# ---------------------------------------------------------------------------
# Pallas kernel: fused 3x3 conv (1 or 2 heads sharing the input window) +
# per-channel affine (+ residual on head 0) (+ per-head ReLU).
# Grid = (cout_tile, batch, row_tile) or (batch, row_tile, cout_tile).
# ---------------------------------------------------------------------------
def _conv3x3_kernel(x_ref, *refs, stride, TR, Wo, Cin, n_heads, relus,
                    has_residual, groups):
    # refs = [w_0, scale_0, bias_0, ..., w_{n-1}, scale_{n-1}, bias_{n-1},
    #         (residual)?, o_0, ..., o_{n-1}]
    head_refs = [refs[3 * h: 3 * h + 3] for h in range(n_heads)]
    idx = 3 * n_heads
    res_ref = refs[idx] if has_residual else None
    if has_residual:
        idx += 1
    out_refs = refs[idx: idx + n_heads]
    TC = out_refs[0].shape[-1]

    def tap(kh, kw):
        if stride == 1:
            # x_ref: (1, TR+2, W+2, Cin) padded row-slab (2-row halo).
            return x_ref[0, kh:kh + TR, kw:kw + Wo, :]
        # x_ref: (1, 4, TR+1, Wo+1, Cin) parity-decomposed padded row-slab;
        # every tap becomes a unit-stride slice.
        p = (kh % 2) * 2 + (kw % 2)
        return x_ref[0, p, kh // 2:kh // 2 + TR, kw // 2:kw // 2 + Wo, :]

    accs = [None] * n_heads
    for g, taps in enumerate(groups):
        if len(taps) == 1:
            patch = tap(*taps[0])
        else:
            # Cin % 128 == 0: lane-aligned concat of kw-shifted taps so a
            # single MXU dot contracts K = len(taps)*Cin (fewer dots + adds).
            patch = jnp.concatenate([tap(kh, kw) for kh, kw in taps], axis=-1)
        patch2d = patch.reshape(TR * Wo, len(taps) * Cin)
        # Each extracted tap window is shared by all heads (conv1 + downsample).
        for h in range(n_heads):
            w_ref = head_refs[h][0]
            d = jnp.dot(patch2d, w_ref[g], preferred_element_type=jnp.float32)
            accs[h] = d if accs[h] is None else accs[h] + d

    for h in range(n_heads):
        _, scale_ref, bias_ref = head_refs[h]
        y = accs[h] * scale_ref[...] + bias_ref[...]          # (TR*Wo, TC) f32
        y = y.reshape(TR, Wo, TC)
        if h == 0 and has_residual:
            y = y + res_ref[0].astype(jnp.float32)
        if relus[h]:
            y = jnp.maximum(y, 0.0)
        out_refs[h][0] = y.astype(out_refs[h].dtype)


def _choose_row_tile(Ho, Wo, W, Cin, TC, n_heads, gK, stride, has_res,
                     out_isz, budget):
    """Largest divisor of Ho (capped at 64) whose per-step working set fits."""
    def est(tr):
        if stride == 1:
            x_b = (tr + 2) * (W + 2) * Cin * 2
        else:
            x_b = 4 * (tr + 1) * (Wo + 1) * Cin * 2
        w_b = 9 * Cin * TC * 2 * n_heads
        acc_b = tr * Wo * TC * 4 * n_heads
        patch_b = tr * Wo * gK * 2 if gK > Cin else 0
        out_b = tr * Wo * TC * out_isz * n_heads
        res_b = tr * Wo * TC * 2 if has_res else 0
        # inputs / outputs double-buffered; accumulators / patch single.
        return 2 * (x_b + w_b + out_b + res_b) + acc_b + patch_b

    for tr in range(min(Ho, 64), 0, -1):
        if Ho % tr == 0 and est(tr) <= budget:
            return tr
    return 1


def conv3x3_fused(x, heads, *, stride=1, residual=None, out_dtype=None):
    """y_h = act_h(conv3x3(x, w_h, stride, pad=1) * scale_h + bias_h [+ res]).

    x: (B, H, W, Cin) NHWC.  heads: list of (w, scale, bias, relu) with
    w: (3, 3, Cin, Cout), scale/bias: (Cout,).  All heads share x and Cout.
    residual (optional, added to head 0): (B, H//stride, W//stride, Cout).
    Returns a list of (B, H//stride, W//stride, Cout) arrays (one per head).
    """
    assert stride in (1, 2)
    B, H, W, Cin = x.shape
    Cout = heads[0][0].shape[-1]
    for (w, _, _, _) in heads:
        assert w.shape == (3, 3, Cin, Cout)
    # TODO(synk): PyTorch Conv2d(stride=2, pad=1) yields ceil(H/2) on odd H/W;
    # odd BEV extents need an extra bottom/right pad at the model boundary.
    assert H % stride == 0 and W % stride == 0
    Ho, Wo = H // stride, W // stride
    out_dtype = out_dtype or x.dtype
    out_isz = jnp.dtype(out_dtype).itemsize
    n_heads = len(heads)
    has_res = residual is not None

    vmem_cap, is_v5e = _chip_info()
    # Leave pipelining / compiler-scratch headroom: ~48 MiB on 64-MiB chips
    # (v7x), ~96 MiB on 128-MiB chips (v5e/v6e).
    vmem_limit = vmem_cap - max(16 * 1024 * 1024, vmem_cap // 4)

    # --- output-channel tiling (lane-dense stores) --------------------------
    if Cout > 128 and Cout % 128 != 0:
        Cout_p = ((Cout + 127) // 128) * 128     # e.g. BEVDet 160 -> 256
    else:
        Cout_p = Cout
    if Cout_p % 256 == 0 and not is_v5e:         # 256 matches the v6e/v7x MXU
        TC = 256
    elif Cout_p % 128 == 0:
        TC = 128
    else:
        TC = Cout_p                              # tiny (toy) channel counts
    n_ct = Cout_p // TC

    # --- 3x3 tap grouping ----------------------------------------------------
    taps_per_group = 3 if (Cin >= 128 and Cin % 128 == 0) else 1
    all_taps = [(kh, kw) for kh in range(3) for kw in range(3)]
    n_groups = 9 // taps_per_group
    groups = tuple(tuple(all_taps[g * taps_per_group:(g + 1) * taps_per_group])
                   for g in range(n_groups))
    gK = taps_per_group * Cin

    # --- row tiling ----------------------------------------------------------
    TR = _choose_row_tile(Ho, Wo, W, Cin, TC, n_heads, gK, stride, has_res,
                          out_isz, budget=int(vmem_limit * 0.8))
    n_rt = Ho // TR
    if B * n_rt * n_ct < 2 and Ho > 1:
        # guarantee >=2 grid steps so v7x's second TensorCore has work.
        for d in range(TR - 1, 0, -1):
            if Ho % d == 0:
                TR, n_rt = d, Ho // d
                break

    # --- input window (pad + 2-row-halo slab, shared by all heads) ----------
    xb = x.astype(_COMPUTE_DTYPE)
    xp = jnp.pad(xb, ((0, 0), (1, 1), (1, 1), (0, 0)))
    if stride == 1:
        rows = np.arange(n_rt)[:, None] * TR + np.arange(TR + 2)[None, :]
        xin = xp[:, rows].reshape(B * n_rt, TR + 2, W + 2, Cin)
        x_block = (1, TR + 2, W + 2, Cin)
        x_map = lambda b, r, c: (b * n_rt + r, 0, 0, 0)
        x_blk_bytes = (TR + 2) * (W + 2) * Cin * 2
    else:
        # Space-to-depth parity split: every stride-2 tap is unit-stride.
        Hh, Wh = Ho + 1, Wo + 1
        xq = xp.reshape(B, Hh, 2, Wh, 2, Cin).transpose(0, 2, 4, 1, 3, 5)
        xq = xq.reshape(B, 4, Hh, Wh, Cin)
        rows = np.arange(n_rt)[:, None] * TR + np.arange(TR + 1)[None, :]
        xin = xq[:, :, rows].transpose(0, 2, 1, 3, 4, 5)
        xin = xin.reshape(B * n_rt, 4, TR + 1, Wh, Cin)
        x_block = (1, 4, TR + 1, Wh, Cin)
        x_map = lambda b, r, c: (b * n_rt + r, 0, 0, 0, 0)
        x_blk_bytes = 4 * (TR + 1) * Wh * Cin * 2

    # --- grid order: keep the bigger block resident --------------------------
    w_blk_bytes = 9 * Cin * TC * 2 * n_heads
    if w_blk_bytes * (B * n_rt) > x_blk_bytes * n_ct:
        grid = (n_ct, B, n_rt)            # cout-tile outermost -> weights stay

        def mk(f):
            return lambda c, b, r: f(b, r, c)
    else:
        grid = (B, n_rt, n_ct)            # cout-tile innermost -> input stays

        def mk(f):
            return lambda b, r, c: f(b, r, c)

    def _padc(a):
        if Cout_p == Cout:
            return a
        return jnp.pad(a, [(0, 0)] * (a.ndim - 1) + [(0, Cout_p - Cout)])

    inputs = [xin]
    in_specs = [pl.BlockSpec(x_block, mk(x_map))]
    relus = []
    w_map = lambda b, r, c: (0, 0, c)
    v_map = lambda b, r, c: (0, c)
    o_map = lambda b, r, c: (b, r, 0, c)
    for (w, sc, bi, act) in heads:
        wq = _padc(w.astype(_COMPUTE_DTYPE).reshape(n_groups, gK, Cout))
        inputs += [wq,
                   _padc(sc.astype(jnp.float32)).reshape(1, Cout_p),
                   _padc(bi.astype(jnp.float32)).reshape(1, Cout_p)]
        in_specs += [pl.BlockSpec((n_groups, gK, TC), mk(w_map)),
                     pl.BlockSpec((1, TC), mk(v_map)),
                     pl.BlockSpec((1, TC), mk(v_map))]
        relus.append(bool(act))

    if has_res:
        inputs.append(_padc(residual.astype(_COMPUTE_DTYPE)))
        in_specs.append(pl.BlockSpec((1, TR, Wo, TC), mk(o_map)))

    kernel = functools.partial(
        _conv3x3_kernel, stride=stride, TR=TR, Wo=Wo, Cin=Cin,
        n_heads=n_heads, relus=tuple(relus), has_residual=has_res,
        groups=groups)

    out_shape = tuple(jax.ShapeDtypeStruct((B, Ho, Wo, Cout_p), out_dtype)
                      for _ in range(n_heads))
    out_specs = tuple(pl.BlockSpec((1, TR, Wo, TC), mk(o_map))
                      for _ in range(n_heads))

    flops = 2 * B * Ho * Wo * 9 * Cin * Cout_p * n_heads
    bytes_accessed = int(
        int(np.prod(xin.shape)) * 2
        + n_heads * (n_groups * gK * Cout_p * 2 + 2 * Cout_p * 4)
        + n_heads * B * Ho * Wo * Cout_p * out_isz
        + (B * Ho * Wo * Cout_p * 2 if has_res else 0))
    cost = pl.CostEstimate(flops=int(flops), transcendentals=0,
                           bytes_accessed=bytes_accessed)

    outs = pl.pallas_call(
        kernel,
        out_shape=out_shape,
        grid=grid,
        in_specs=in_specs,
        out_specs=out_specs,
        compiler_params=pltpu.CompilerParams(
            # Every (cout_tile, batch, row_tile) step is fully independent.
            dimension_semantics=("parallel", "parallel", "parallel"),
            vmem_limit_bytes=int(vmem_limit)),
        cost_estimate=cost,
    )(*inputs)
    if not isinstance(outs, (tuple, list)):
        outs = (outs,)
    if Cout_p != Cout:
        outs = [o[..., :Cout] for o in outs]
    return list(outs)


# ---------------------------------------------------------------------------
# Model: parameters + forward
# ---------------------------------------------------------------------------
def _fold_bn(gamma, beta, mean, var):
    scale = gamma / jnp.sqrt(var + _BN_EPS)
    return scale, beta - mean * scale


def init_params(key, numC_input, num_layer, stride, num_channels=None):
    if num_channels is None:
        num_channels = [numC_input * 2 ** (i + 1) for i in range(len(num_layer))]
    stages = []
    curr = numC_input
    for i in range(len(num_layer)):
        blocks = []
        for j in range(num_layer[i]):
            cin = curr if j == 0 else num_channels[i]
            cout = num_channels[i]
            s = stride[i] if j == 0 else 1
            key, *ks = jax.random.split(key, 14)
            g1 = 1.0 + 0.1 * jax.random.normal(ks[1], (cout,))
            b1 = 0.1 * jax.random.normal(ks[2], (cout,))
            m1 = 0.1 * jax.random.normal(ks[3], (cout,))
            v1 = jax.random.uniform(ks[4], (cout,), minval=0.5, maxval=1.5)
            g2 = 1.0 + 0.1 * jax.random.normal(ks[6], (cout,))
            b2 = 0.1 * jax.random.normal(ks[7], (cout,))
            m2 = 0.1 * jax.random.normal(ks[8], (cout,))
            v2 = jax.random.uniform(ks[9], (cout,), minval=0.5, maxval=1.5)
            blk = dict(
                stride=s,
                # Weights pre-cast to the bf16 MXU operand dtype, BN folded to
                # f32 scale/bias at init: no per-forward HBM casts.
                w1=(0.1 * jax.random.normal(ks[0], (3, 3, cin, cout))
                    ).astype(_COMPUTE_DTYPE),
                bn1=_fold_bn(g1, b1, m1, v1),
                w2=(0.1 * jax.random.normal(ks[5], (3, 3, cout, cout))
                    ).astype(_COMPUTE_DTYPE),
                bn2=_fold_bn(g2, b2, m2, v2),
            )
            if j == 0:  # downsample: nn.Conv2d(cin, cout, 3, stride, 1) w/ bias
                blk['wd'] = (0.1 * jax.random.normal(ks[10], (3, 3, cin, cout))
                             ).astype(_COMPUTE_DTYPE)
                blk['bd'] = (0.1 * jax.random.normal(ks[11], (cout,))
                             ).astype(jnp.float32)
            blocks.append(blk)
        curr = num_channels[i]
        stages.append(blocks)
    return stages


def basic_block(x, blk):
    s = blk['stride']
    s1, b1 = blk['bn1']
    s2, b2 = blk['bn2']
    if 'wd' in blk:
        cout = blk['wd'].shape[-1]
        # conv1+BN+ReLU and the downsample conv share one input window / one
        # pad + parity split: single fused pallas_call with two outputs.
        out, identity = conv3x3_fused(
            x,
            [(blk['w1'], s1, b1, True),
             (blk['wd'], jnp.ones((cout,), jnp.float32), blk['bd'], False)],
            stride=s)
    else:
        (out,) = conv3x3_fused(x, [(blk['w1'], s1, b1, True)], stride=s)
        identity = x
    (y,) = conv3x3_fused(out, [(blk['w2'], s2, b2, True)], stride=1,
                         residual=identity)
    return y


def resnet_for_bevdet(x_nchw, stages, backbone_output_ids=None):
    # TODO(synk): torch.utils.checkpoint (with_cp=True) is a memory-only
    # rematerialization trick; forward semantics are unchanged, so it is omitted.
    if backbone_output_ids is None:
        backbone_output_ids = range(len(stages))
    x = jnp.transpose(x_nchw, (0, 2, 3, 1)).astype(_COMPUTE_DTYPE)  # NCHW->NHWC
    feats = []
    for lid, blocks in enumerate(stages):
        for blk in blocks:
            x = basic_block(x, blk)
        if lid in backbone_output_ids:
            feats.append(jnp.transpose(x, (0, 3, 1, 2)).astype(jnp.float32))
    return feats


# ---------------------------------------------------------------------------
# Pure-JAX reference (mirrors the bf16-operand / f32-accumulate arithmetic,
# for numerical verification only).
# ---------------------------------------------------------------------------
def _conv_ref(x, w, stride):
    return jax.lax.conv_general_dilated(
        x.astype(_COMPUTE_DTYPE), w.astype(_COMPUTE_DTYPE),
        (stride, stride), ((1, 1), (1, 1)),
        dimension_numbers=('NHWC', 'HWIO', 'NHWC'),
        preferred_element_type=jnp.float32)


def _block_ref(x, blk):
    s = blk['stride']
    s1, b1 = blk['bn1']
    s2, b2 = blk['bn2']
    out = jnp.maximum(_conv_ref(x, blk['w1'], s) * s1 + b1, 0.0)
    out = out.astype(_COMPUTE_DTYPE)
    if 'wd' in blk:
        identity = (_conv_ref(x, blk['wd'], s) + blk['bd']).astype(_COMPUTE_DTYPE)
    else:
        identity = x
    y = _conv_ref(out, blk['w2'], 1) * s2 + b2 + identity.astype(jnp.float32)
    return jnp.maximum(y, 0.0).astype(_COMPUTE_DTYPE)


def resnet_ref(x_nchw, stages):
    x = jnp.transpose(x_nchw, (0, 2, 3, 1)).astype(_COMPUTE_DTYPE)
    feats = []
    for blocks in stages:
        for blk in blocks:
            x = _block_ref(x, blk)
        feats.append(jnp.transpose(x, (0, 3, 1, 2)).astype(jnp.float32))
    return feats


if __name__ == "__main__":
    key = jax.random.PRNGKey(0)
    kx, kp = jax.random.split(key)

    numC_input = 4
    x = jax.random.normal(kx, (2, numC_input, 16, 16), jnp.float32)  # NCHW
    stages = init_params(kp, numC_input,
                         num_layer=[2, 2, 2], stride=[2, 2, 2])

    feats = resnet_for_bevdet(x, stages)
    feats = [jax.block_until_ready(f) for f in feats]

    refs = resnet_ref(x, stages)
    expected_shapes = [(2, 8, 8, 8), (2, 16, 4, 4), (2, 32, 2, 2)]
    for f, r, es in zip(feats, refs, expected_shapes):
        assert f.shape == es, (f.shape, es)
        np.testing.assert_allclose(np.asarray(f), np.asarray(r),
                                   rtol=1e-2, atol=1e-2)

    print("KERNEL_OK")
</pallas_src>

<mosaic_0001>
module attributes {stable_mosaic.version = 11 : i64} {
  func.func @_conv3x3_kernel(%arg0: i32, %arg1: i32, %arg2: i32, %arg3: memref<1x4x9x9x4xbf16, #tpu.memory_space<vmem>>, %arg4: memref<9x4x8xbf16, #tpu.memory_space<vmem>>, %arg5: memref<1x8xf32, #tpu.memory_space<vmem>>, %arg6: memref<1x8xf32, #tpu.memory_space<vmem>>, %arg7: memref<9x4x8xbf16, #tpu.memory_space<vmem>>, %arg8: memref<1x8xf32, #tpu.memory_space<vmem>>, %arg9: memref<1x8xf32, #tpu.memory_space<vmem>>, %arg10: memref<1x8x8x8xbf16, #tpu.memory_space<vmem>>, %arg11: memref<1x8x8x8xbf16, #tpu.memory_space<vmem>>) attributes {dimension_semantics = [#tpu.dimension_semantics<parallel>, #tpu.dimension_semantics<parallel>, #tpu.dimension_semantics<parallel>], iteration_bounds = array<i64: 2, 1, 1>, scalar_prefetch = 0 : i64, scratch_operands = 0 : i64, tpu.core_type = #tpu.core_type<tc>, window_params = [{transform_indices = @transform_0, window_bounds = array<i64: 1, 4, 9, 9, 4>}, {transform_indices = @transform_1, window_bounds = array<i64: 9, 4, 8>}, {transform_indices = @transform_2, window_bounds = array<i64: 1, 8>}, {transform_indices = @transform_3, window_bounds = array<i64: 1, 8>}, {transform_indices = @transform_4, window_bounds = array<i64: 9, 4, 8>}, {transform_indices = @transform_5, window_bounds = array<i64: 1, 8>}, {transform_indices = @transform_6, window_bounds = array<i64: 1, 8>}, {transform_indices = @transform_7, window_bounds = array<i64: 1, 8, 8, 8>}, {transform_indices = @transform_8, window_bounds = array<i64: 1, 8, 8, 8>}]} {
    %c0 = arith.constant 0 : index
    %c0_0 = arith.constant 0 : index
    %c0_1 = arith.constant 0 : index
    %c0_2 = arith.constant 0 : index
    %c0_3 = arith.constant 0 : index
    %0 = vector.load %arg3[%c0, %c0_0, %c0_1, %c0_2, %c0_3] : memref<1x4x9x9x4xbf16, #tpu.memory_space<vmem>>, vector<1x1x8x8x4xbf16>
    %1 = vector.shape_cast %0 : vector<1x1x8x8x4xbf16> to vector<8x8x4xbf16>
    %2 = vector.shape_cast %1 : vector<8x8x4xbf16> to vector<64x4xbf16>
    %c0_4 = arith.constant 0 : index
    %c0_5 = arith.constant 0 : index
    %c0_6 = arith.constant 0 : index
    %3 = vector.load %arg4[%c0_4, %c0_5, %c0_6] : memref<9x4x8xbf16, #tpu.memory_space<vmem>>, vector<1x4x8xbf16>
    %4 = vector.shape_cast %3 : vector<1x4x8xbf16> to vector<4x8xbf16>
    %cst = arith.constant dense<0.000000e+00> : vector<64x8xf32>
    %5 = tpu.matmul %2, %4, %cst {dimension_numbers = #tpu.dot_dimension_numbers<[1], [0], [0], [1], [0, 0, 1, 1], [], []>} : vector<64x4xbf16>, vector<4x8xbf16>, vector<64x8xf32> -> vector<64x8xf32>
    %c0_7 = arith.constant 0 : index
    %c0_8 = arith.constant 0 : index
    %c0_9 = arith.constant 0 : index
    %6 = vector.load %arg7[%c0_7, %c0_8, %c0_9] : memref<9x4x8xbf16, #tpu.memory_space<vmem>>, vector<1x4x8xbf16>
    %7 = vector.shape_cast %6 : vector<1x4x8xbf16> to vector<4x8xbf16>
    %cst_10 = arith.constant dense<0.000000e+00> : vector<64x8xf32>
    %8 = tpu.matmul %2, %7, %cst_10 {dimension_numbers = #tpu.dot_dimension_numbers<[1], [0], [0], [1], [0, 0, 1, 1], [], []>} : vector<64x4xbf16>, vector<4x8xbf16>, vector<64x8xf32> -> vector<64x8xf32>
    %c0_11 = arith.constant 0 : index
    %c1 = arith.constant 1 : index
    %c0_12 = arith.constant 0 : index
    %c0_13 = arith.constant 0 : index
    %c0_14 = arith.constant 0 : index
    %9 = vector.load %arg3[%c0_11, %c1, %c0_12, %c0_13, %c0_14] : memref<1x4x9x9x4xbf16, #tpu.memory_space<vmem>>, vector<1x1x8x8x4xbf16>
    %10 = vector.shape_cast %9 : vector<1x1x8x8x4xbf16> to vector<8x8x4xbf16>
    %11 = vector.shape_cast %10 : vector<8x8x4xbf16> to vector<64x4xbf16>
    %c1_15 = arith.constant 1 : index
    %c0_16 = arith.constant 0 : index
    %c0_17 = arith.constant 0 : index
    %12 = vector.load %arg4[%c1_15, %c0_16, %c0_17] : memref<9x4x8xbf16, #tpu.memory_space<vmem>>, vector<1x4x8xbf16>
    %13 = vector.shape_cast %12 : vector<1x4x8xbf16> to vector<4x8xbf16>
    %cst_18 = arith.constant dense<0.000000e+00> : vector<64x8xf32>
    %14 = tpu.matmul %11, %13, %cst_18 {dimension_numbers = #tpu.dot_dimension_numbers<[1], [0], [0], [1], [0, 0, 1, 1], [], []>} : vector<64x4xbf16>, vector<4x8xbf16>, vector<64x8xf32> -> vector<64x8xf32>
    %15 = arith.addf %5, %14 : vector<64x8xf32>
    %c1_19 = arith.constant 1 : index
    %c0_20 = arith.constant 0 : index
    %c0_21 = arith.constant 0 : index
    %16 = vector.load %arg7[%c1_19, %c0_20, %c0_21] : memref<9x4x8xbf16, #tpu.memory_space<vmem>>, vector<1x4x8xbf16>
    %17 = vector.shape_cast %16 : vector<1x4x8xbf16> to vector<4x8xbf16>
    %cst_22 = arith.constant dense<0.000000e+00> : vector<64x8xf32>
    %18 = tpu.matmul %11, %17, %cst_22 {dimension_numbers = #tpu.dot_dimension_numbers<[1], [0], [0], [1], [0, 0, 1, 1], [], []>} : vector<64x4xbf16>, vector<4x8xbf16>, vector<64x8xf32> -> vector<64x8xf32>
    %19 = arith.addf %8, %18 : vector<64x8xf32>
    %c0_23 = arith.constant 0 : index
    %c0_24 = arith.constant 0 : index
    %c0_25 = arith.constant 0 : index
    %c1_26 = arith.constant 1 : index
    %c0_27 = arith.constant 0 : index
    %20 = vector.load %arg3[%c0_23, %c0_24, %c0_25, %c1_26, %c0_27] : memref<1x4x9x9x4xbf16, #tpu.memory_space<vmem>>, vector<1x1x8x8x4xbf16>
    %21 = vector.shape_cast %20 : vector<1x1x8x8x4xbf16> to vector<8x8x4xbf16>
    %22 = vector.shape_cast %21 : vector<8x8x4xbf16> to vector<64x4xbf16>
    %c2 = arith.constant 2 : index
    %c0_28 = arith.constant 0 : index
    %c0_29 = arith.constant 0 : index
    %23 = vector.load %arg4[%c2, %c0_28, %c0_29] : memref<9x4x8xbf16, #tpu.memory_space<vmem>>, vector<1x4x8xbf16>
    %24 = vector.shape_cast %23 : vector<1x4x8xbf16> to vector<4x8xbf16>
    %cst_30 = arith.constant dense<0.000000e+00> : vector<64x8xf32>
    %25 = tpu.matmul %22, %24, %cst_30 {dimension_numbers = #tpu.dot_dimension_numbers<[1], [0], [0], [1], [0, 0, 1, 1], [], []>} : vector<64x4xbf16>, vector<4x8xbf16>, vector<64x8xf32> -> vector<64x8xf32>
    %26 = arith.addf %15, %25 : vector<64x8xf32>
    %c2_31 = arith.constant 2 : index
    %c0_32 = arith.constant 0 : index
    %c0_33 = arith.constant 0 : index
    %27 = vector.load %arg7[%c2_31, %c0_32, %c0_33] : memref<9x4x8xbf16, #tpu.memory_space<vmem>>, vector<1x4x8xbf16>
    %28 = vector.shape_cast %27 : vector<1x4x8xbf16> to vector<4x8xbf16>
    %cst_34 = arith.constant dense<0.000000e+00> : vector<64x8xf32>
    %29 = tpu.matmul %22, %28, %cst_34 {dimension_numbers = #tpu.dot_dimension_numbers<[1], [0], [0], [1], [0, 0, 1, 1], [], []>} : vector<64x4xbf16>, vector<4x8xbf16>, vector<64x8xf32> -> vector<64x8xf32>
    %30 = arith.addf %19, %29 : vector<64x8xf32>
    %c0_35 = arith.constant 0 : index
    %c2_36 = arith.constant 2 : index
    %c0_37 = arith.constant 0 : index
    %c0_38 = arith.constant 0 : index
    %c0_39 = arith.constant 0 : index
    %31 = vector.load %arg3[%c0_35, %c2_36, %c0_37, %c0_38, %c0_39] : memref<1x4x9x9x4xbf16, #tpu.memory_space<vmem>>, vector<1x1x8x8x4xbf16>
    %32 = vector.shape_cast %31 : vector<1x1x8x8x4xbf16> to vector<8x8x4xbf16>
    %33 = vector.shape_cast %32 : vector<8x8x4xbf16> to vector<64x4xbf16>
    %c3 = arith.constant 3 : index
    %c0_40 = arith.constant 0 : index
    %c0_41 = arith.constant 0 : index
    %34 = vector.load %arg4[%c3, %c0_40, %c0_41] : memref<9x4x8xbf16, #tpu.memory_space<vmem>>, vector<1x4x8xbf16>
    %35 = vector.shape_cast %34 : vector<1x4x8xbf16> to vector<4x8xbf16>
    %cst_42 = arith.constant dense<0.000000e+00> : vector<64x8xf32>
    %36 = tpu.matmul %33, %35, %cst_42 {dimension_numbers = #tpu.dot_dimension_numbers<[1], [0], [0], [1], [0, 0, 1, 1], [], []>} : vector<64x4xbf16>, vector<4x8xbf16>, vector<64x8xf32> -> vector<64x8xf32>
    %37 = arith.addf %26, %36 : vector<64x8xf32>
    %c3_43 = arith.constant 3 : index
    %c0_44 = arith.constant 0 : index
    %c0_45 = arith.constant 0 : index
    %38 = vector.load %arg7[%c3_43, %c0_44, %c0_45] : memref<9x4x8xbf16, #tpu.memory_space<vmem>>, vector<1x4x8xbf16>
    %39 = vector.shape_cast %38 : vector<1x4x8xbf16> to vector<4x8xbf16>
    %cst_46 = arith.constant dense<0.000000e+00> : vector<64x8xf32>
    %40 = tpu.matmul %33, %39, %cst_46 {dimension_numbers = #tpu.dot_dimension_numbers<[1], [0], [0], [1], [0, 0, 1, 1], [], []>} : vector<64x4xbf16>, vector<4x8xbf16>, vector<64x8xf32> -> vector<64x8xf32>
    %41 = arith.addf %30, %40 : vector<64x8xf32>
    %c0_47 = arith.constant 0 : index
    %c3_48 = arith.constant 3 : index
    %c0_49 = arith.constant 0 : index
    %c0_50 = arith.constant 0 : index
    %c0_51 = arith.constant 0 : index
    %42 = vector.load %arg3[%c0_47, %c3_48, %c0_49, %c0_50, %c0_51] : memref<1x4x9x9x4xbf16, #tpu.memory_space<vmem>>, vector<1x1x8x8x4xbf16>
    %43 = vector.shape_cast %42 : vector<1x1x8x8x4xbf16> to vector<8x8x4xbf16>
    %44 = vector.shape_cast %43 : vector<8x8x4xbf16> to vector<64x4xbf16>
    %c4 = arith.constant 4 : index
    %c0_52 = arith.constant 0 : index
    %c0_53 = arith.constant 0 : index
    %45 = vector.load %arg4[%c4, %c0_52, %c0_53] : memref<9x4x8xbf16, #tpu.memory_space<vmem>>, vector<1x4x8xbf16>
    %46 = vector.shape_cast %45 : vector<1x4x8xbf16> to vector<4x8xbf16>
    %cst_54 = arith.constant dense<0.000000e+00> : vector<64x8xf32>
    %47 = tpu.matmul %44, %46, %cst_54 {dimension_numbers = #tpu.dot_dimension_numbers<[1], [0], [0], [1], [0, 0, 1, 1], [], []>} : vector<64x4xbf16>, vector<4x8xbf16>, vector<64x8xf32> -> vector<64x8xf32>
    %48 = arith.addf %37, %47 : vector<64x8xf32>
    %c4_55 = arith.constant 4 : index
    %c0_56 = arith.constant 0 : index
    %c0_57 = arith.constant 0 : index
    %49 = vector.load %arg7[%c4_55, %c0_56, %c0_57] : memref<9x4x8xbf16, #tpu.memory_space<vmem>>, vector<1x4x8xbf16>
    %50 = vector.shape_cast %49 : vector<1x4x8xbf16> to vector<4x8xbf16>
    %cst_58 = arith.constant dense<0.000000e+00> : vector<64x8xf32>
    %51 = tpu.matmul %44, %50, %cst_58 {dimension_numbers = #tpu.dot_dimension_numbers<[1], [0], [0], [1], [0, 0, 1, 1], [], []>} : vector<64x4xbf16>, vector<4x8xbf16>, vector<64x8xf32> -> vector<64x8xf32>
    %52 = arith.addf %41, %51 : vector<64x8xf32>
    %c0_59 = arith.constant 0 : index
    %c2_60 = arith.constant 2 : index
    %c0_61 = arith.constant 0 : index
    %c1_62 = arith.constant 1 : index
    %c0_63 = arith.constant 0 : index
    %53 = vector.load %arg3[%c0_59, %c2_60, %c0_61, %c1_62, %c0_63] : memref<1x4x9x9x4xbf16, #tpu.memory_space<vmem>>, vector<1x1x8x8x4xbf16>
    %54 = vector.shape_cast %53 : vector<1x1x8x8x4xbf16> to vector<8x8x4xbf16>
    %55 = vector.shape_cast %54 : vector<8x8x4xbf16> to vector<64x4xbf16>
    %c5 = arith.constant 5 : index
    %c0_64 = arith.constant 0 : index
    %c0_65 = arith.constant 0 : index
    %56 = vector.load %arg4[%c5, %c0_64, %c0_65] : memref<9x4x8xbf16, #tpu.memory_space<vmem>>, vector<1x4x8xbf16>
    %57 = vector.shape_cast %56 : vector<1x4x8xbf16> to vector<4x8xbf16>
    %cst_66 = arith.constant dense<0.000000e+00> : vector<64x8xf32>
    %58 = tpu.matmul %55, %57, %cst_66 {dimension_numbers = #tpu.dot_dimension_numbers<[1], [0], [0], [1], [0, 0, 1, 1], [], []>} : vector<64x4xbf16>, vector<4x8xbf16>, vector<64x8xf32> -> vector<64x8xf32>
    %59 = arith.addf %48, %58 : vector<64x8xf32>
    %c5_67 = arith.constant 5 : index
    %c0_68 = arith.constant 0 : index
    %c0_69 = arith.constant 0 : index
    %60 = vector.load %arg7[%c5_67, %c0_68, %c0_69] : memref<9x4x8xbf16, #tpu.memory_space<vmem>>, vector<1x4x8xbf16>
    %61 = vector.shape_cast %60 : vector<1x4x8xbf16> to vector<4x8xbf16>
    %cst_70 = arith.constant dense<0.000000e+00> : vector<64x8xf32>
    %62 = tpu.matmul %55, %61, %cst_70 {dimension_numbers = #tpu.dot_dimension_numbers<[1], [0], [0], [1], [0, 0, 1, 1], [], []>} : vector<64x4xbf16>, vector<4x8xbf16>, vector<64x8xf32> -> vector<64x8xf32>
    %63 = arith.addf %52, %62 : vector<64x8xf32>
    %c0_71 = arith.constant 0 : index
    %c0_72 = arith.constant 0 : index
    %c1_73 = arith.constant 1 : index
    %c0_74 = arith.constant 0 : index
    %c0_75 = arith.constant 0 : index
    %64 = vector.load %arg3[%c0_71, %c0_72, %c1_73, %c0_74, %c0_75] : memref<1x4x9x9x4xbf16, #tpu.memory_space<vmem>>, vector<1x1x8x8x4xbf16>
    %65 = vector.shape_cast %64 : vector<1x1x8x8x4xbf16> to vector<8x8x4xbf16>
    %66 = vector.shape_cast %65 : vector<8x8x4xbf16> to vector<64x4xbf16>
    %c6 = arith.constant 6 : index
    %c0_76 = arith.constant 0 : index
    %c0_77 = arith.constant 0 : index
    %67 = vector.load %arg4[%c6, %c0_76, %c0_77] : memref<9x4x8xbf16, #tpu.memory_space<vmem>>, vector<1x4x8xbf16>
    %68 = vector.shape_cast %67 : vector<1x4x8xbf16> to vector<4x8xbf16>
    %cst_78 = arith.constant dense<0.000000e+00> : vector<64x8xf32>
    %69 = tpu.matmul %66, %68, %cst_78 {dimension_numbers = #tpu.dot_dimension_numbers<[1], [0], [0], [1], [0, 0, 1, 1], [], []>} : vector<64x4xbf16>, vector<4x8xbf16>, vector<64x8xf32> -> vector<64x8xf32>
    %70 = arith.addf %59, %69 : vector<64x8xf32>
    %c6_79 = arith.constant 6 : index
    %c0_80 = arith.constant 0 : index
    %c0_81 = arith.constant 0 : index
    %71 = vector.load %arg7[%c6_79, %c0_80, %c0_81] : memref<9x4x8xbf16, #tpu.memory_space<vmem>>, vector<1x4x8xbf16>
    %72 = vector.shape_cast %71 : vector<1x4x8xbf16> to vector<4x8xbf16>
    %cst_82 = arith.constant dense<0.000000e+00> : vector<64x8xf32>
    %73 = tpu.matmul %66, %72, %cst_82 {dimension_numbers = #tpu.dot_dimension_numbers<[1], [0], [0], [1], [0, 0, 1, 1], [], []>} : vector<64x4xbf16>, vector<4x8xbf16>, vector<64x8xf32> -> vector<64x8xf32>
    %74 = arith.addf %63, %73 : vector<64x8xf32>
    %c0_83 = arith.constant 0 : index
    %c1_84 = arith.constant 1 : index
    %c1_85 = arith.constant 1 : index
    %c0_86 = arith.constant 0 : index
    %c0_87 = arith.constant 0 : index
    %75 = vector.load %arg3[%c0_83, %c1_84, %c1_85, %c0_86, %c0_87] : memref<1x4x9x9x4xbf16, #tpu.memory_space<vmem>>, vector<1x1x8x8x4xbf16>
    %76 = vector.shape_cast %75 : vector<1x1x8x8x4xbf16> to vector<8x8x4xbf16>
    %77 = vector.shape_cast %76 : vector<8x8x4xbf16> to vector<64x4xbf16>
    %c7 = arith.constant 7 : index
    %c0_88 = arith.constant 0 : index
    %c0_89 = arith.constant 0 : index
    %78 = vector.load %arg4[%c7, %c0_88, %c0_89] : memref<9x4x8xbf16, #tpu.memory_space<vmem>>, vector<1x4x8xbf16>
    %79 = vector.shape_cast %78 : vector<1x4x8xbf16> to vector<4x8xbf16>
    %cst_90 = arith.constant dense<0.000000e+00> : vector<64x8xf32>
    %80 = tpu.matmul %77, %79, %cst_90 {dimension_numbers = #tpu.dot_dimension_numbers<[1], [0], [0], [1], [0, 0, 1, 1], [], []>} : vector<64x4xbf16>, vector<4x8xbf16>, vector<64x8xf32> -> vector<64x8xf32>
    %81 = arith.addf %70, %80 : vector<64x8xf32>
    %c7_91 = arith.constant 7 : index
    %c0_92 = arith.constant 0 : index
    %c0_93 = arith.constant 0 : index
    %82 = vector.load %arg7[%c7_91, %c0_92, %c0_93] : memref<9x4x8xbf16, #tpu.memory_space<vmem>>, vector<1x4x8xbf16>
    %83 = vector.shape_cast %82 : vector<1x4x8xbf16> to vector<4x8xbf16>
    %cst_94 = arith.constant dense<0.000000e+00> : vector<64x8xf32>
    %84 = tpu.matmul %77, %83, %cst_94 {dimension_numbers = #tpu.dot_dimension_numbers<[1], [0], [0], [1], [0, 0, 1, 1], [], []>} : vector<64x4xbf16>, vector<4x8xbf16>, vector<64x8xf32> -> vector<64x8xf32>
    %85 = arith.addf %74, %84 : vector<64x8xf32>
    %c0_95 = arith.constant 0 : index
    %c0_96 = arith.constant 0 : index
    %c1_97 = arith.constant 1 : index
    %c1_98 = arith.constant 1 : index
    %c0_99 = arith.constant 0 : index
    %86 = vector.load %arg3[%c0_95, %c0_96, %c1_97, %c1_98, %c0_99] : memref<1x4x9x9x4xbf16, #tpu.memory_space<vmem>>, vector<1x1x8x8x4xbf16>
    %87 = vector.shape_cast %86 : vector<1x1x8x8x4xbf16> to vector<8x8x4xbf16>
    %88 = vector.shape_cast %87 : vector<8x8x4xbf16> to vector<64x4xbf16>
    %c8 = arith.constant 8 : index
    %c0_100 = arith.constant 0 : index
    %c0_101 = arith.constant 0 : index
    %89 = vector.load %arg4[%c8, %c0_100, %c0_101] : memref<9x4x8xbf16, #tpu.memory_space<vmem>>, vector<1x4x8xbf16>
    %90 = vector.shape_cast %89 : vector<1x4x8xbf16> to vector<4x8xbf16>
    %cst_102 = arith.constant dense<0.000000e+00> : vector<64x8xf32>
    %91 = tpu.matmul %88, %90, %cst_102 {dimension_numbers = #tpu.dot_dimension_numbers<[1], [0], [0], [1], [0, 0, 1, 1], [], []>} : vector<64x4xbf16>, vector<4x8xbf16>, vector<64x8xf32> -> vector<64x8xf32>
    %92 = arith.addf %81, %91 : vector<64x8xf32>
    %c8_103 = arith.constant 8 : index
    %c0_104 = arith.constant 0 : index
    %c0_105 = arith.constant 0 : index
    %93 = vector.load %arg7[%c8_103, %c0_104, %c0_105] : memref<9x4x8xbf16, #tpu.memory_space<vmem>>, vector<1x4x8xbf16>
    %94 = vector.shape_cast %93 : vector<1x4x8xbf16> to vector<4x8xbf16>
    %cst_106 = arith.constant dense<0.000000e+00> : vector<64x8xf32>
    %95 = tpu.matmul %88, %94, %cst_106 {dimension_numbers = #tpu.dot_dimension_numbers<[1], [0], [0], [1], [0, 0, 1, 1], [], []>} : vector<64x4xbf16>, vector<4x8xbf16>, vector<64x8xf32> -> vector<64x8xf32>
    %96 = arith.addf %85, %95 : vector<64x8xf32>
    %c0_107 = arith.constant 0 : index
    %c0_108 = arith.constant 0 : index
    %97 = vector.load %arg5[%c0_107, %c0_108] : memref<1x8xf32, #tpu.memory_space<vmem>>, vector<1x8xf32>
    %98 = vector.broadcast %97 : vector<1x8xf32> to vector<64x8xf32>
    %99 = arith.mulf %92, %98 : vector<64x8xf32>
    %c0_109 = arith.constant 0 : index
    %c0_110 = arith.constant 0 : index
    %100 = vector.load %arg6[%c0_109, %c0_110] : memref<1x8xf32, #tpu.memory_space<vmem>>, vector<1x8xf32>
    %101 = vector.broadcast %100 : vector<1x8xf32> to vector<64x8xf32>
    %102 = arith.addf %99, %101 : vector<64x8xf32>
    %103 = vector.shape_cast %102 : vector<64x8xf32> to vector<8x8x8xf32>
    %cst_111 = arith.constant 0.000000e+00 : f32
    %104 = vector.broadcast %cst_111 : f32 to vector<8x8x8xf32>
    %105 = arith.maximumf %103, %104 : vector<8x8x8xf32>
    %106 = arith.truncf %105 : vector<8x8x8xf32> to vector<8x8x8xbf16>
    %c0_112 = arith.constant 0 : index
    %c0_113 = arith.constant 0 : index
    %c0_114 = arith.constant 0 : index
    %c0_115 = arith.constant 0 : index
    %107 = vector.load %arg10[%c0_112, %c0_113, %c0_114, %c0_115] : memref<1x8x8x8xbf16, #tpu.memory_space<vmem>>, vector<1x8x8x8xbf16>
    %108 = vector.shape_cast %107 : vector<1x8x8x8xbf16> to vector<8x8x8xbf16>
    %109 = vector.shape_cast %106 : vector<8x8x8xbf16> to vector<1x8x8x8xbf16>
    tpu.vector_store %arg10[%c0_112, %c0_113, %c0_114, %c0_115], %109 {strides = array<i32>} : memref<1x8x8x8xbf16, #tpu.memory_space<vmem>>, vector<1x8x8x8xbf16>,
    %c0_116 = arith.constant 0 : index
    %c0_117 = arith.constant 0 : index
    %110 = vector.load %arg8[%c0_116, %c0_117] : memref<1x8xf32, #tpu.memory_space<vmem>>, vector<1x8xf32>
    %111 = vector.broadcast %110 : vector<1x8xf32> to vector<64x8xf32>
    %112 = arith.mulf %96, %111 : vector<64x8xf32>
    %c0_118 = arith.constant 0 : index
    %c0_119 = arith.constant 0 : index
    %113 = vector.load %arg9[%c0_118, %c0_119] : memref<1x8xf32, #tpu.memory_space<vmem>>, vector<1x8xf32>
    %114 = vector.broadcast %113 : vector<1x8xf32> to vector<64x8xf32>
    %115 = arith.addf %112, %114 : vector<64x8xf32>
    %116 = vector.shape_cast %115 : vector<64x8xf32> to vector<8x8x8xf32>
    %117 = arith.truncf %116 : vector<8x8x8xf32> to vector<8x8x8xbf16>
    %c0_120 = arith.constant 0 : index
    %c0_121 = arith.constant 0 : index
    %c0_122 = arith.constant 0 : index
    %c0_123 = arith.constant 0 : index
    %118 = vector.load %arg11[%c0_120, %c0_121, %c0_122, %c0_123] : memref<1x8x8x8xbf16, #tpu.memory_space<vmem>>, vector<1x8x8x8xbf16>
    %119 = vector.shape_cast %118 : vector<1x8x8x8xbf16> to vector<8x8x8xbf16>
    %120 = vector.shape_cast %117 : vector<8x8x8xbf16> to vector<1x8x8x8xbf16>
    tpu.vector_store %arg11[%c0_120, %c0_121, %c0_122, %c0_123], %120 {strides = array<i32>} : memref<1x8x8x8xbf16, #tpu.memory_space<vmem>>, vector<1x8x8x8xbf16>,
    return
  }
  func.func @transform_0(%arg0: i32, %arg1: i32, %arg2: i32) -> (i32, i32, i32, i32, i32) {
    %c1_i32 = arith.constant 1 : i32
    %0 = arith.muli %arg0, %c1_i32 : i32
    %1 = arith.addi %0, %arg1 : i32
    %c0_i32 = arith.constant 0 : i32
    %c0_i32_0 = arith.constant 0 : i32
    %c0_i32_1 = arith.constant 0 : i32
    %c0_i32_2 = arith.constant 0 : i32
    %c0_i32_3 = arith.constant 0 : i32
    return %1, %c0_i32, %c0_i32_0, %c0_i32_1, %c0_i32_2 : i32, i32, i32, i32, i32
  }
  func.func @transform_1(%arg0: i32, %arg1: i32, %arg2: i32) -> (i32, i32, i32) {
    %c0_i32 = arith.constant 0 : i32
    %c0_i32_0 = arith.constant 0 : i32
    %c0_i32_1 = arith.constant 0 : i32
    return %c0_i32, %c0_i32_0, %arg2 : i32, i32, i32
  }
  func.func @transform_2(%arg0: i32, %arg1: i32, %arg2: i32) -> (i32, i32) {
    %c0_i32 = arith.constant 0 : i32
    %c0_i32_0 = arith.constant 0 : i32
    return %c0_i32, %arg2 : i32, i32
  }
  func.func @transform_3(%arg0: i32, %arg1: i32, %arg2: i32) -> (i32, i32) {
    %c0_i32 = arith.constant 0 : i32
    %c0_i32_0 = arith.constant 0 : i32
    return %c0_i32, %arg2 : i32, i32
  }
  func.func @transform_4(%arg0: i32, %arg1: i32, %arg2: i32) -> (i32, i32, i32) {
    %c0_i32 = arith.constant 0 : i32
    %c0_i32_0 = arith.constant 0 : i32
    %c0_i32_1 = arith.constant 0 : i32
    return %c0_i32, %c0_i32_0, %arg2 : i32, i32, i32
  }
  func.func @transform_5(%arg0: i32, %arg1: i32, %arg2: i32) -> (i32, i32) {
    %c0_i32 = arith.constant 0 : i32
    %c0_i32_0 = arith.constant 0 : i32
    return %c0_i32, %arg2 : i32, i32
  }
  func.func @transform_6(%arg0: i32, %arg1: i32, %arg2: i32) -> (i32, i32) {
    %c0_i32 = arith.constant 0 : i32
    %c0_i32_0 = arith.constant 0 : i32
    return %c0_i32, %arg2 : i32, i32
  }
  func.func @transform_7(%arg0: i32, %arg1: i32, %arg2: i32) -> (i32, i32, i32, i32) {
    %c0_i32 = arith.constant 0 : i32
    %c0_i32_0 = arith.constant 0 : i32
    return %arg0, %arg1, %c0_i32, %arg2 : i32, i32, i32, i32
  }
  func.func @transform_8(%arg0: i32, %arg1: i32, %arg2: i32) -> (i32, i32, i32, i32) {
    %c0_i32 = arith.constant 0 : i32
    %c0_i32_0 = arith.constant 0 : i32
    return %arg0, %arg1, %c0_i32, %arg2 : i32, i32, i32, i32
  }
}

</mosaic_0001>

<llo_original>
// kernel: tpu_custom_call.1
$region0: #{tpu_custom_call.1}
  #allocation0 [shape = 'u32[]', space=smem, size = 0x4, offset = 0x4, fixed_abs, tag = 'smem constant byte address 0x4 - core index']
  #allocation1 [shape = 'u32[72,128]{1,0:T(1,128)}', space=vmem, size = 0x9000, scoped, tag = 'internal scratch']
  %s0 = inlined_call_operand.vmem [shape: bf16[2,4,9,9,4], index: 0, kind: input, shape index: {}]
  %s1 = inlined_call_operand.vmem [shape: bf16[9,4,8], index: 1, kind: input, shape index: {}]
  %s2 = inlined_call_operand.vmem [shape: f32[1,8], index: 2, kind: input, shape index: {}]
  %s3 = inlined_call_operand.vmem [shape: f32[1,8], index: 3, kind: input, shape index: {}]
  %s4 = inlined_call_operand.vmem [shape: bf16[9,4,8], index: 4, kind: input, shape index: {}]
  %s5 = inlined_call_operand.vmem [shape: f32[1,8], index: 5, kind: input, shape index: {}]
  %s6 = inlined_call_operand.vmem [shape: f32[1,8], index: 6, kind: input, shape index: {}]
  %s7 = inlined_call_operand.hbm [shape: bf16[2,8,8,8], index: 7, kind: output, shape index: {0}]
  %s8 = inlined_call_operand.hbm [shape: bf16[2,8,8,8], index: 8, kind: output, shape index: {1}]
  %9 = xla_tuple %s7, %s8
  %s10 = sld [smem:[#allocation0]]
  $region69: #{tpu_custom_call.1} parent=0
    _
  %s12 = ssub.s32 1, %s10
  %s13 = scalar_select 0, %s12, %s10
  $region1: #{tpu_custom_call.1} parent=0
    #allocation2 [shape = 'u8[32768]{0}', space=vmem, size = 0x8000, scoped, tag = 'output window, operand 0']
    #allocation3 [shape = 's32[2]{0}', space=sflag, size = 0x8, scoped, tag = 'scoped memory for tpu_custom_call.1']
    #allocation4 [shape = 'u8[32768]{0}', space=vmem, size = 0x8000, scoped, tag = 'output window, operand 1']
    #allocation5 [shape = 's32[2]{0}', space=sflag, size = 0x8, scoped, tag = 'scoped memory for tpu_custom_call.1']
    %14 = vsyncpa [#allocation3], 0
    %s15 = scalar_lea.sflag [#allocation3], 1
    %16 = vsyncpa %s15, 0
    %17 = vsyncpa [#allocation5], 0
    %s18 = scalar_lea.sflag [#allocation5], 1
    %19 = vsyncpa %s18, 0
    loop: start=0, step=1, limit=4
    $region2: #{tpu_custom_call.1} parent=1 // loop_pre_header
      _
    $region3: #{tpu_custom_call.1} parent=1 // loop_header
      %s21 = sphi 0, %s25
      %p22 = scmp.ge.s32.totalorder %s21, 4
      %s28 = sphi 0, %s47
      %s29 = sphi 0, %s43
      %s30 = sphi 0, %s39
      %s31 = sphi 0, %s28
      %s32 = sphi 0, %s29
      %s33 = sphi 0, %s30
      %s34 = sphi 0, %s31
      %s35 = sphi 0, %s32
      %s36 = sphi 0, %s33
      %s52 = sphi 0, %s54
      %s55 = sphi 0, %s52
      %s56 = sphi 0, %s55
      %s72 = sphi 0, %s56
      %s78 = sphi 0, %s80
      %s81 = sphi 0, %s78
      %s82 = sphi 0, %s81
      %s98 = sphi 0, %s82
      %s104 = sphi 0, %s106
      %s107 = sphi 0, %s104
      %s108 = sphi 0, %s107
      %s124 = sphi 0, %s108
      %s130 = sphi 0, %s132
      %s133 = sphi 0, %s130
      %s134 = sphi 0, %s133
      %s150 = sphi 0, %s134
      %s156 = sphi 0, %s158
      %s159 = sphi 0, %s156
      %s160 = sphi 0, %s159
      %s176 = sphi 0, %s160
      %s182 = sphi 0, %s184
      %s185 = sphi 0, %s182
      %s186 = sphi 0, %s185
      %s202 = sphi 0, %s186
      %s208 = sphi 0, %s210
      %s211 = sphi 0, %s208
      %s212 = sphi 0, %s211
      %s228 = sphi 0, %s212
      %s238 = sphi 0, %s240
      %s241 = sphi 0, %s238
      %s242 = sphi 0, %s241
      %s258 = sphi 0, %s242
      %s268 = sphi 0, %s270
      %s271 = sphi 0, %s268
      %s272 = sphi 0, %s271
      %s288 = sphi 0, %s272
    $region4: #{tpu_custom_call.1} parent=1 // loop_header_branch
      %24 = sbr.rel (%p22) target = $region8
    $region5: #{tpu_custom_call.1} parent=1 // loop_body
      %s26 = ssub.s32 %s21, 1
      %s27 = ssub.s32 %s21, 2
      %s37 = sadd.s32 1, %s30
      %p38 = scmp.ge.s32.totalorder %s37, 1
      %s39 = scalar_select %p38, 0, %s37
      %s40 = sadd.s32 1, %s29
      %s41 = scalar_select %p38, %s40, %s29
      %p42 = scmp.ge.s32.totalorder %s41, 1
      %s43 = scalar_select %p42, 0, %s41
      %s44 = sadd.s32 1, %s28
      %s45 = scalar_select %p42, %s44, %s28
      %p46 = scmp.ge.s32.totalorder %s45, 2
      %s47 = scalar_select %p46, 0, %s45
      %s48 = sadd.s32 %s28, %s29
      %s49 = sadd.s32 %s47, %s43
      %s50 = ssub.s32 %s48, %s49
      %p51 = scmp.eq.s32.totalorder %s50, 0
      %s53 = sadd.s32 %s52, 1
      %s54 = scalar_select %p51, %s52, %s53
      %p57 = pneg %p51
      %p58 = scmp.eq.s32.totalorder %s21, 1
      %p59 = por %p57, %p58
      %p60 = scmp.ne.s32.totalorder %s52, %s55
      %p61 = scmp.eq.s32.totalorder %s21, 0
      %p62 = por %p60, %p61
      %p63 = scmp.ne.s32.totalorder %s52, %s55
      %p64 = scmp.eq.s32.totalorder %s26, 1
      %p65 = por %p63, %p64
      %p66 = scmp.ne.s32.totalorder %s55, %s56
      %p67 = scmp.eq.s32.totalorder %s26, 0
      %p68 = por %p66, %p67
      %p69 = scmp.ne.s32.totalorder %s55, %s56
      %p70 = scmp.eq.s32.totalorder %s27, 1
      %p71 = por %p69, %p70
      %p73 = scmp.ne.s32.totalorder %s56, %s72
      %p74 = scmp.eq.s32.totalorder %s27, 0
      %p75 = por %p73, %p74
      %s76 = ssub.s32 %s30, %s39
      %p77 = scmp.eq.s32.totalorder %s76, 0
      %s79 = sadd.s32 %s78, 1
      %s80 = scalar_select %p77, %s78, %s79
      %p83 = pneg %p77
      %p84 = scmp.eq.s32.totalorder %s21, 1
      %p85 = por %p83, %p84
      %p86 = scmp.ne.s32.totalorder %s78, %s81
      %p87 = scmp.eq.s32.totalorder %s21, 0
      %p88 = por %p86, %p87
      %p89 = scmp.ne.s32.totalorder %s78, %s81
      %p90 = scmp.eq.s32.totalorder %s26, 1
      %p91 = por %p89, %p90
      %p92 = scmp.ne.s32.totalorder %s81, %s82
      %p93 = scmp.eq.s32.totalorder %s26, 0
      %p94 = por %p92, %p93
      %p95 = scmp.ne.s32.totalorder %s81, %s82
      %p96 = scmp.eq.s32.totalorder %s27, 1
      %p97 = por %p95, %p96
      %p99 = scmp.ne.s32.totalorder %s82, %s98
      %p100 = scmp.eq.s32.totalorder %s27, 0
      %p101 = por %p99, %p100
      %s102 = ssub.s32 %s30, %s39
      %p103 = scmp.eq.s32.totalorder %s102, 0
      %s105 = sadd.s32 %s104, 1
      %s106 = scalar_select %p103, %s104, %s105
      %p109 = pneg %p103
      %p110 = scmp.eq.s32.totalorder %s21, 1
      %p111 = por %p109, %p110
      %p112 = scmp.ne.s32.totalorder %s104, %s107
      %p113 = scmp.eq.s32.totalorder %s21, 0
      %p114 = por %p112, %p113
      %p115 = scmp.ne.s32.totalorder %s104, %s107
      %p116 = scmp.eq.s32.totalorder %s26, 1
      %p117 = por %p115, %p116
      %p118 = scmp.ne.s32.totalorder %s107, %s108
      %p119 = scmp.eq.s32.totalorder %s26, 0
      %p120 = por %p118, %p119
      %p121 = scmp.ne.s32.totalorder %s107, %s108
      %p122 = scmp.eq.s32.totalorder %s27, 1
      %p123 = por %p121, %p122
      %p125 = scmp.ne.s32.totalorder %s108, %s124
      %p126 = scmp.eq.s32.totalorder %s27, 0
      %p127 = por %p125, %p126
      %s128 = ssub.s32 %s30, %s39
      %p129 = scmp.eq.s32.totalorder %s128, 0
      %s131 = sadd.s32 %s130, 1
      %s132 = scalar_select %p129, %s130, %s131
      %p135 = pneg %p129
      %p136 = scmp.eq.s32.totalorder %s21, 1
      %p137 = por %p135, %p136
      %p138 = scmp.ne.s32.totalorder %s130, %s133
      %p139 = scmp.eq.s32.totalorder %s21, 0
      %p140 = por %p138, %p139
      %p141 = scmp.ne.s32.totalorder %s130, %s133
      %p142 = scmp.eq.s32.totalorder %s26, 1
      %p143 = por %p141, %p142
      %p144 = scmp.ne.s32.totalorder %s133, %s134
      %p145 = scmp.eq.s32.totalorder %s26, 0
      %p146 = por %p144, %p145
      %p147 = scmp.ne.s32.totalorder %s133, %s134
      %p148 = scmp.eq.s32.totalorder %s27, 1
      %p149 = por %p147, %p148
      %p151 = scmp.ne.s32.totalorder %s134, %s150
      %p152 = scmp.eq.s32.totalorder %s27, 0
      %p153 = por %p151, %p152
      %s154 = ssub.s32 %s30, %s39
      %p155 = scmp.eq.s32.totalorder %s154, 0
      %s157 = sadd.s32 %s156, 1
      %s158 = scalar_select %p155, %s156, %s157
      %p161 = pneg %p155
      %p162 = scmp.eq.s32.totalorder %s21, 1
      %p163 = por %p161, %p162
      %p164 = scmp.ne.s32.totalorder %s156, %s159
      %p165 = scmp.eq.s32.totalorder %s21, 0
      %p166 = por %p164, %p165
      %p167 = scmp.ne.s32.totalorder %s156, %s159
      %p168 = scmp.eq.s32.totalorder %s26, 1
      %p169 = por %p167, %p168
      %p170 = scmp.ne.s32.totalorder %s159, %s160
      %p171 = scmp.eq.s32.totalorder %s26, 0
      %p172 = por %p170, %p171
      %p173 = scmp.ne.s32.totalorder %s159, %s160
      %p174 = scmp.eq.s32.totalorder %s27, 1
      %p175 = por %p173, %p174
      %p177 = scmp.ne.s32.totalorder %s160, %s176
      %p178 = scmp.eq.s32.totalorder %s27, 0
      %p179 = por %p177, %p178
      %s180 = ssub.s32 %s30, %s39
      %p181 = scmp.eq.s32.totalorder %s180, 0
      %s183 = sadd.s32 %s182, 1
      %s184 = scalar_select %p181, %s182, %s183
      %p187 = pneg %p181
      %p188 = scmp.eq.s32.totalorder %s21, 1
      %p189 = por %p187, %p188
      %p190 = scmp.ne.s32.totalorder %s182, %s185
      %p191 = scmp.eq.s32.totalorder %s21, 0
      %p192 = por %p190, %p191
      %p193 = scmp.ne.s32.totalorder %s182, %s185
      %p194 = scmp.eq.s32.totalorder %s26, 1
      %p195 = por %p193, %p194
      %p196 = scmp.ne.s32.totalorder %s185, %s186
      %p197 = scmp.eq.s32.totalorder %s26, 0
      %p198 = por %p196, %p197
      %p199 = scmp.ne.s32.totalorder %s185, %s186
      %p200 = scmp.eq.s32.totalorder %s27, 1
      %p201 = por %p199, %p200
      %p203 = scmp.ne.s32.totalorder %s186, %s202
      %p204 = scmp.eq.s32.totalorder %s27, 0
      %p205 = por %p203, %p204
      %s206 = ssub.s32 %s30, %s39
      %p207 = scmp.eq.s32.totalorder %s206, 0
      %s209 = sadd.s32 %s208, 1
      %s210 = scalar_select %p207, %s208, %s209
      %p213 = pneg %p207
      %p214 = scmp.eq.s32.totalorder %s21, 1
      %p215 = por %p213, %p214
      %p216 = scmp.ne.s32.totalorder %s208, %s211
      %p217 = scmp.eq.s32.totalorder %s21, 0
      %p218 = por %p216, %p217
      %p219 = scmp.ne.s32.totalorder %s208, %s211
      %p220 = scmp.eq.s32.totalorder %s26, 1
      %p221 = por %p219, %p220
      %p222 = scmp.ne.s32.totalorder %s211, %s212
      %p223 = scmp.eq.s32.totalorder %s26, 0
      %p224 = por %p222, %p223
      %p225 = scmp.ne.s32.totalorder %s211, %s212
      %p226 = scmp.eq.s32.totalorder %s27, 1
      %p227 = por %p225, %p226
      %p229 = scmp.ne.s32.totalorder %s212, %s228
      %p230 = scmp.eq.s32.totalorder %s27, 0
      %p231 = por %p229, %p230
      %s232 = ssub.s32 %s28, %s47
      %s233 = ssub.s32 %s29, %s43
      %s234 = sor.u32 %s232, %s233
      %s235 = ssub.s32 %s30, %s39
      %s236 = sor.u32 %s234, %s235
      %p237 = scmp.eq.s32.totalorder %s236, 0
      %s239 = sadd.s32 %s238, 1
      %s240 = scalar_select %p237, %s238, %s239
      %p243 = pneg %p237
      %p244 = scmp.eq.s32.totalorder %s21, 1
      %p245 = por %p243, %p244
      %p246 = scmp.ne.s32.totalorder %s238, %s241
      %p247 = scmp.eq.s32.totalorder %s21, 0
      %p248 = por %p246, %p247
      %p249 = scmp.ne.s32.totalorder %s238, %s241
      %p250 = scmp.eq.s32.totalorder %s26, 1
      %p251 = por %p249, %p250
      %p252 = scmp.ne.s32.totalorder %s241, %s242
      %p253 = scmp.eq.s32.totalorder %s26, 0
      %p254 = por %p252, %p253
      %p255 = scmp.ne.s32.totalorder %s241, %s242
      %p256 = scmp.eq.s32.totalorder %s27, 1
      %p257 = por %p255, %p256
      %p259 = scmp.ne.s32.totalorder %s242, %s258
      %p260 = scmp.eq.s32.totalorder %s27, 0
      %p261 = por %p259, %p260
      %s262 = ssub.s32 %s28, %s47
      %s263 = ssub.s32 %s29, %s43
      %s264 = sor.u32 %s262, %s263
      %s265 = ssub.s32 %s30, %s39
      %s266 = sor.u32 %s264, %s265
      %p267 = scmp.eq.s32.totalorder %s266, 0
      %s269 = sadd.s32 %s268, 1
      %s270 = scalar_select %p267, %s268, %s269
      %p273 = pneg %p267
      %p274 = scmp.eq.s32.totalorder %s21, 1
      %p275 = por %p273, %p274
      %p276 = scmp.ne.s32.totalorder %s268, %s271
      %p277 = scmp.eq.s32.totalorder %s21, 0
      %p278 = por %p276, %p277
      %p279 = scmp.ne.s32.totalorder %s268, %s271
      %p280 = scmp.eq.s32.totalorder %s26, 1
      %p281 = por %p279, %p280
      %p282 = scmp.ne.s32.totalorder %s271, %s272
      %p283 = scmp.eq.s32.totalorder %s26, 0
      %p284 = por %p282, %p283
      %p285 = scmp.ne.s32.totalorder %s271, %s272
      %p286 = scmp.eq.s32.totalorder %s27, 1
      %p287 = por %p285, %p286
      %p289 = scmp.ne.s32.totalorder %s272, %s288
      %p290 = scmp.eq.s32.totalorder %s27, 0
      %p291 = por %p289, %p290
      %p292 = scmp.le.s32.totalorder 1, %s21
      %p293 = scmp.lt.s32.totalorder %s21, 3
      %p294 = pnand %p292, %p293
      %p295 = pneg %p294
      // Predicated region
      $region9: #{tpu_custom_call.1} parent=5 // pred_check
        _
      $region10: #{tpu_custom_call.1} parent=5 // pred_check_branch
        %297 = sbr.rel (%p294) target = $region12
      $region11: #{tpu_custom_call.1} parent=5 // pred_region
        %s298 = ssub.s32 %s21, 1
        // Predicated region
        $region13: #{tpu_custom_call.1} parent=11 // pred_check
          %p299 = pneg %p94
        $region14: #{tpu_custom_call.1} parent=11 // pred_check_branch
          %301 = sbr.rel (%p299) target = $region16
        $region15: #{tpu_custom_call.1} parent=11 // pred_region
          %p302 = scmp.lt.s32.totalorder %s33, 0
          %s303 = scalar_select %p302, %s33, 0
          %s304 = smul.addr %s303, 2
          %s305 = scalar_lea.vmem %s1, %s304
        $region16: #{tpu_custom_call.1} parent=11 // pred_fallthru
          _
        // Predicated region
        $region17: #{tpu_custom_call.1} parent=11 // pred_check
          %p306 = pneg %p120
        $region18: #{tpu_custom_call.1} parent=11 // pred_check_branch
          %308 = sbr.rel (%p306) target = $region20
        $region19: #{tpu_custom_call.1} parent=11 // pred_region
          %p309 = scmp.lt.s32.totalorder %s33, 0
          %s310 = scalar_select %p309, %s33, 0
          %s311 = scalar_lea.vmem %s2, %s310
        $region20: #{tpu_custom_call.1} parent=11 // pred_fallthru
          _
        // Predicated region
        $region21: #{tpu_custom_call.1} parent=11 // pred_check
          %p312 = pneg %p146
        $region22: #{tpu_custom_call.1} parent=11 // pred_check_branch
          %314 = sbr.rel (%p312) target = $region24
        $region23: #{tpu_custom_call.1} parent=11 // pred_region
          %p315 = scmp.lt.s32.totalorder %s33, 0
          %s316 = scalar_select %p315, %s33, 0
          %s317 = scalar_lea.vmem %s3, %s316
        $region24: #{tpu_custom_call.1} parent=11 // pred_fallthru
          _
        // Predicated region
        $region25: #{tpu_custom_call.1} parent=11 // pred_check
          %p318 = pneg %p172
        $region26: #{tpu_custom_call.1} parent=11 // pred_check_branch
          %320 = sbr.rel (%p318) target = $region28
        $region27: #{tpu_custom_call.1} parent=11 // pred_region
          %p321 = scmp.lt.s32.totalorder %s33, 0
          %s322 = scalar_select %p321, %s33, 0
          %s323 = smul.addr %s322, 2
          %s324 = scalar_lea.vmem %s4, %s323
        $region28: #{tpu_custom_call.1} parent=11 // pred_fallthru
          _
        // Predicated region
        $region29: #{tpu_custom_call.1} parent=11 // pred_check
          %p325 = pneg %p198
        $region30: #{tpu_custom_call.1} parent=11 // pred_check_branch
          %327 = sbr.rel (%p325) target = $region32
        $region31: #{tpu_custom_call.1} parent=11 // pred_region
          %p328 = scmp.lt.s32.totalorder %s33, 0
          %s329 = scalar_select %p328, %s33, 0
          %s330 = scalar_lea.vmem %s5, %s329
        $region32: #{tpu_custom_call.1} parent=11 // pred_fallthru
          _
        // Predicated region
        $region33: #{tpu_custom_call.1} parent=11 // pred_check
          %p331 = pneg %p224
        $region34: #{tpu_custom_call.1} parent=11 // pred_check_branch
          %333 = sbr.rel (%p331) target = $region36
        $region35: #{tpu_custom_call.1} parent=11 // pred_region
          %p334 = scmp.lt.s32.totalorder %s33, 0
          %s335 = scalar_select %p334, %s33, 0
          %s336 = scalar_lea.vmem %s6, %s335
        $region36: #{tpu_custom_call.1} parent=11 // pred_fallthru
          _
      $region12: #{tpu_custom_call.1} parent=5 // pred_fallthru
        _
      %p337 = scmp.lt.s32.totalorder %s21, 2
      // Predicated region
      $region37: #{tpu_custom_call.1} parent=5 // pred_check
        %p338 = pneg %p337
      $region38: #{tpu_custom_call.1} parent=5 // pred_check_branch
        %340 = sbr.rel (%p338) target = $region40
      $region39: #{tpu_custom_call.1} parent=5 // pred_region
        // Predicated region
        $region41: #{tpu_custom_call.1} parent=39 // pred_check
          %p341 = pneg %p62
        $region42: #{tpu_custom_call.1} parent=39 // pred_check_branch
          %343 = sbr.rel (%p341) target = $region44
        $region43: #{tpu_custom_call.1} parent=39 // pred_region
          %s344 = sadd.s32 %s28, %s29
          %p345 = scmp.lt.s32.totalorder %s344, 1
          %s346 = scalar_select %p345, %s344, 1
          %s347 = smul.addr %s346, 72
          %s348 = smul.addr %s347, 4
          %s349 = scalar_lea.vmem %s0, %s348
          %s350 = sadd.s32 %s28, %s29
        $region44: #{tpu_custom_call.1} parent=39 // pred_fallthru
          _
      $region40: #{tpu_custom_call.1} parent=5 // pred_fallthru
        _
      %p351 = scmp.le.s32.totalorder 1, %s21
      %p352 = scmp.lt.s32.totalorder %s21, 3
      %p353 = pnand %p351, %p352
      %p354 = pneg %p353
      // Predicated region
      $region45: #{tpu_custom_call.1} parent=5 // pred_check
        _
      $region46: #{tpu_custom_call.1} parent=5 // pred_check_branch
        %356 = sbr.rel (%p353) target = $region48
      $region47: #{tpu_custom_call.1} parent=5 // pred_region
        %s357 = ssub.s32 %s21, 1
        %s358 = sadd.s32 %s31, %s32
        %p359 = scmp.lt.s32.totalorder %s358, 1
        %s360 = scalar_select %p359, %s358, 1
        %s361 = smul.addr %s360, 72
        %s362 = smul.addr %s361, 4
        %s363 = scalar_lea.vmem %s0, %s362
        %p364 = pneg %p68
        %p365 = pneg %p65
        %p366 = scmp.lt.s32.totalorder %s33, 0
        %s367 = scalar_select %p366, %s33, 0
        %s368 = smul.addr %s367, 2
        %s369 = scalar_lea.vmem %s1, %s368
        %p370 = pneg %p94
        %p371 = pneg %p91
        %p372 = scmp.lt.s32.totalorder %s33, 0
        %s373 = scalar_select %p372, %s33, 0
        %s374 = scalar_lea.vmem %s2, %s373
        %p375 = pneg %p120
        %p376 = pneg %p117
        %p377 = scmp.lt.s32.totalorder %s33, 0
        %s378 = scalar_select %p377, %s33, 0
        %s379 = scalar_lea.vmem %s3, %s378
        %p380 = pneg %p146
        %p381 = pneg %p143
        %p382 = scmp.lt.s32.totalorder %s33, 0
        %s383 = scalar_select %p382, %s33, 0
        %s384 = smul.addr %s383, 2
        %s385 = scalar_lea.vmem %s4, %s384
        %p386 = pneg %p172
        %p387 = pneg %p169
        %p388 = scmp.lt.s32.totalorder %s33, 0
        %s389 = scalar_select %p388, %s33, 0
        %s390 = scalar_lea.vmem %s5, %s389
        %p391 = pneg %p198
        %p392 = pneg %p195
        %p393 = scmp.lt.s32.totalorder %s33, 0
        %s394 = scalar_select %p393, %s33, 0
        %s395 = scalar_lea.vmem %s6, %s394
        %p396 = pneg %p224
        %p397 = pneg %p221
        %p398 = pneg %p254
        %p399 = pneg %p251
        %s400 = sand.u32 %s241, 1
        %s401 = scalar_lea.sflag [#allocation3], %s400
        %s402 = sand.u32 %s241, 1
        %s403 = smul.addr %s402, 32
        %s404 = scalar_lea.vmem [#allocation2], %s403
        %p405 = pneg %p284
        %p406 = pneg %p281
        %s407 = sand.u32 %s271, 1
        %s408 = scalar_lea.sflag [#allocation5], %s407
        %s409 = sand.u32 %s271, 1
        %s410 = smul.addr %s409, 32
        %s411 = scalar_lea.vmem [#allocation4], %s410
        %s412 = sadd.s32 %s31, %s32
        %p413 = scmp.lt.s32.totalorder %s412, 1
        %s414 = scalar_select %p413, %s412, 1
        %s415 = smul.addr %s414, 72
        %s416 = smul.addr %s415, 4
        %s417 = scalar_lea.vmem %s0, %s416
        %s418 = sadd.s32 %s31, %s32
        %p419 = scmp.lt.s32.totalorder %s33, 0
        %s420 = scalar_select %p419, %s33, 0
        %s421 = smul.addr %s420, 2
        %s422 = scalar_lea.vmem %s1, %s421
        %p423 = scmp.lt.s32.totalorder %s33, 0
        %s424 = scalar_select %p423, %s33, 0
        %s425 = scalar_lea.vmem %s2, %s424
        %p426 = scmp.lt.s32.totalorder %s33, 0
        %s427 = scalar_select %p426, %s33, 0
        %s428 = scalar_lea.vmem %s3, %s427
        %p429 = scmp.lt.s32.totalorder %s33, 0
        %s430 = scalar_select %p429, %s33, 0
        %s431 = smul.addr %s430, 2
        %s432 = scalar_lea.vmem %s4, %s431
        %p433 = scmp.lt.s32.totalorder %s33, 0
        %s434 = scalar_select %p433, %s33, 0
        %s435 = scalar_lea.vmem %s5, %s434
        %p436 = scmp.lt.s32.totalorder %s33, 0
        %s437 = scalar_select %p436, %s33, 0
        %s438 = scalar_lea.vmem %s6, %s437
        %s439 = smul.u32 8, %s32
        %s440 = smul.u32 8, %s32
        %v442 = vld [vmem:[%s417] sm:$0xf]
        %v443 = vld [vmem:[%s417 + $0x8] sm:$0xf]
        %v444 = vld [vmem:[%s417 + $0x10] sm:$0xf]
        %v445 = vld [vmem:[%s417 + $0x18] sm:$0xf]
        %v446 = vld [vmem:[%s417 + $0x20] sm:$0xf]
        %v447 = vld [vmem:[%s417 + $0x28] sm:$0xf]
        %v448 = vld [vmem:[%s417 + $0x30] sm:$0xf]
        %v449 = vld [vmem:[%s417 + $0x38] sm:$0xf]
        %v450 = vld [vmem:[%s422] sm:$0x3]
        %v451 = vld [vmem:[%s432] sm:$0x3]
        %s452 = scalar_lea.vmem %s417, 72
        %v453 = vld [vmem:[%s452] sm:$0xf]
        %v454 = vld [vmem:[%s452 + $0x8] sm:$0xf]
        %v455 = vld [vmem:[%s452 + $0x10] sm:$0xf]
        %v456 = vld [vmem:[%s452 + $0x18] sm:$0xf]
        %v457 = vld [vmem:[%s452 + $0x20] sm:$0xf]
        %v458 = vld [vmem:[%s452 + $0x28] sm:$0xf]
        %v459 = vld [vmem:[%s452 + $0x30] sm:$0xf]
        %v460 = vld [vmem:[%s452 + $0x38] sm:$0xf]
        %s461 = scalar_lea.vmem %s422, 2
        %v462 = vld [vmem:[%s461] sm:$0x3]
        %v471 = vunpack.c.l.b16 %v453
        %v472 = vunpack.c.l.b16 %v454
        %v473 = vunpack.c.l.b16 %v455
        %v474 = vunpack.c.l.b16 %v456
        %v475 = vunpack.c.l.b16 %v457
        %v476 = vunpack.c.l.b16 %v458
        %v477 = vunpack.c.l.b16 %v459
        %v478 = vunpack.c.l.b16 %v460
        %v479 = vpack.c.b16 %v472, %v471
        %v480 = vpack.c.b16 %v474, %v473
        %v481 = vpack.c.b16 %v476, %v475
        %v482 = vpack.c.b16 %v478, %v477
        %vm483 = vcmask 31744
        %v485 = vsel %vm483, %v479, 0
        %v488 = vsel %vm483, %v480, 0
        %v491 = vsel %vm483, %v481, 0
        %v494 = vsel %vm483, %v482, 0
        %vm496 = vcmask 1041408
        %v498 = vsel %vm496, %v462, 0
        %500 = vmatpush.bf16.msra.mxu0 0
        %501 = vmatpush.bf16.msra.mxu0 0
        %502 = vmatpush.bf16.msra.mxu0 0
        %503 = vmatpush.bf16.msra.mxu0 0
        %504 = vmatpush.bf16.msra.mxu0 0
        %505 = vmatpush.bf16.msra.mxu0 0
        %506 = vmatpush.bf16.msra.mxu0 0
        %507 = vmatpush.bf16.msra.mxu0 %v498
        %508 = vmatmul.bf16.gmra.mxu0 %v485
        %v509 = vpop.f32.mrf.mxu0
        %v510 = vadd.f32 0.0, %v509
        %v511 = vpop.f32.mrf.mxu0
        %v512 = vadd.f32 0.0, %v511
        %513 = vmatmul.bf16.gmra.mxu0 %v488
        %v514 = vpop.f32.mrf.mxu0
        %v515 = vadd.f32 0.0, %v514
        %v516 = vpop.f32.mrf.mxu0
        %v517 = vadd.f32 0.0, %v516
        %518 = vmatmul.bf16.gmra.mxu0 %v491
        %v519 = vpop.f32.mrf.mxu0
        %v520 = vadd.f32 0.0, %v519
        %v521 = vpop.f32.mrf.mxu0
        %v522 = vadd.f32 0.0, %v521
        %523 = vmatmul.bf16.gmra.mxu0 %v494
        %v524 = vpop.f32.mrf.mxu0
        %v525 = vadd.f32 0.0, %v524
        %v526 = vpop.f32.mrf.mxu0
        %v527 = vadd.f32 0.0, %v526
        %528 = vdwg.mxu0
        %v537 = vunpack.c.l.b16 %v442
        %v538 = vunpack.c.l.b16 %v443
        %v539 = vunpack.c.l.b16 %v444
        %v540 = vunpack.c.l.b16 %v445
        %v541 = vunpack.c.l.b16 %v446
        %v542 = vunpack.c.l.b16 %v447
        %v543 = vunpack.c.l.b16 %v448
        %v544 = vunpack.c.l.b16 %v449
        %v545 = vpack.c.b16 %v538, %v537
        %v546 = vpack.c.b16 %v540, %v539
        %v547 = vpack.c.b16 %v542, %v541
        %v548 = vpack.c.b16 %v544, %v543
        %v550 = vsel %vm483, %v545, 0
        %v553 = vsel %vm483, %v546, 0
        %v556 = vsel %vm483, %v547, 0
        %v559 = vsel %vm483, %v548, 0
        %v562 = vsel %vm496, %v450, 0
        %564 = vmatpush.bf16.msra.mxu0 0
        %565 = vmatpush.bf16.msra.mxu0 0
        %566 = vmatpush.bf16.msra.mxu0 0
        %567 = vmatpush.bf16.msra.mxu0 0
        %568 = vmatpush.bf16.msra.mxu0 0
        %569 = vmatpush.bf16.msra.mxu0 0
        %570 = vmatpush.bf16.msra.mxu0 0
        %571 = vmatpush.bf16.msra.mxu0 %v562
        %572 = vmatmul.bf16.gmra.mxu0 %v550
        %v573 = vpop.f32.mrf.mxu0
        %v574 = vadd.f32 %v510, %v573
        %v575 = vpop.f32.mrf.mxu0
        %v576 = vadd.f32 %v512, %v575
        %577 = vmatmul.bf16.gmra.mxu0 %v553
        %v578 = vpop.f32.mrf.mxu0
        %v579 = vadd.f32 %v515, %v578
        %v580 = vpop.f32.mrf.mxu0
        %v581 = vadd.f32 %v517, %v580
        %582 = vmatmul.bf16.gmra.mxu0 %v556
        %v583 = vpop.f32.mrf.mxu0
        %v584 = vadd.f32 %v520, %v583
        %v585 = vpop.f32.mrf.mxu0
        %v586 = vadd.f32 %v522, %v585
        %587 = vmatmul.bf16.gmra.mxu0 %v559
        %v588 = vpop.f32.mrf.mxu0
        %v589 = vadd.f32 %v525, %v588
        %v590 = vpop.f32.mrf.mxu0
        %v591 = vadd.f32 %v527, %v590
        %592 = vdwg.mxu0
        %s593 = scalar_lea.vmem %s432, 2
        %v594 = vld [vmem:[%s593] sm:$0x3]
        %v596 = vsel %vm496, %v594, 0
        %598 = vmatpush.bf16.msra.mxu0 0
        %599 = vmatpush.bf16.msra.mxu0 0
        %600 = vmatpush.bf16.msra.mxu0 0
        %601 = vmatpush.bf16.msra.mxu0 0
        %602 = vmatpush.bf16.msra.mxu0 0
        %603 = vmatpush.bf16.msra.mxu0 0
        %604 = vmatpush.bf16.msra.mxu0 0
        %605 = vmatpush.bf16.msra.mxu0 %v596
        %606 = vmatmul.bf16.gmra.mxu0 %v485
        %v607 = vpop.f32.mrf.mxu0
        %v608 = vadd.f32 0.0, %v607
        %v609 = vpop.f32.mrf.mxu0
        %v610 = vadd.f32 0.0, %v609
        %611 = vmatmul.bf16.gmra.mxu0 %v488
        %v612 = vpop.f32.mrf.mxu0
        %v613 = vadd.f32 0.0, %v612
        %v614 = vpop.f32.mrf.mxu0
        %v615 = vadd.f32 0.0, %v614
        %616 = vmatmul.bf16.gmra.mxu0 %v491
        %v617 = vpop.f32.mrf.mxu0
        %v618 = vadd.f32 0.0, %v617
        %v619 = vpop.f32.mrf.mxu0
        %v620 = vadd.f32 0.0, %v619
        %621 = vmatmul.bf16.gmra.mxu0 %v494
        %v622 = vpop.f32.mrf.mxu0
        %v623 = vadd.f32 0.0, %v622
        %v624 = vpop.f32.mrf.mxu0
        %v625 = vadd.f32 0.0, %v624
        %626 = vdwg.mxu0
        %v628 = vsel %vm496, %v451, 0
        %630 = vmatpush.bf16.msra.mxu0 0
        %631 = vmatpush.bf16.msra.mxu0 0
        %632 = vmatpush.bf16.msra.mxu0 0
        %633 = vmatpush.bf16.msra.mxu0 0
        %634 = vmatpush.bf16.msra.mxu0 0
        %635 = vmatpush.bf16.msra.mxu0 0
        %636 = vmatpush.bf16.msra.mxu0 0
        %637 = vmatpush.bf16.msra.mxu0 %v628
        %638 = vmatmul.bf16.gmra.mxu0 %v550
        %v639 = vpop.f32.mrf.mxu0
        %v640 = vadd.f32 %v608, %v639
        %v641 = vpop.f32.mrf.mxu0
        %v642 = vadd.f32 %v610, %v641
        %643 = vmatmul.bf16.gmra.mxu0 %v553
        %v644 = vpop.f32.mrf.mxu0
        %v645 = vadd.f32 %v613, %v644
        %v646 = vpop.f32.mrf.mxu0
        %v647 = vadd.f32 %v615, %v646
        %648 = vmatmul.bf16.gmra.mxu0 %v556
        %v649 = vpop.f32.mrf.mxu0
        %v650 = vadd.f32 %v618, %v649
        %v651 = vpop.f32.mrf.mxu0
        %v652 = vadd.f32 %v620, %v651
        %653 = vmatmul.bf16.gmra.mxu0 %v559
        %v654 = vpop.f32.mrf.mxu0
        %v655 = vadd.f32 %v623, %v654
        %v656 = vpop.f32.mrf.mxu0
        %v657 = vadd.f32 %v625, %v656
        %658 = vdwg.mxu0
        %v659 = vld [vmem:[%s417] sm:$0xf]
        %v660 = vld [vmem:[%s417 + $0x4] sm:$0x1]
        %v661 = vld [vmem:[%s417 + $0x8] sm:$0xf]
        %v662 = vld [vmem:[%s417 + $0xc] sm:$0x1]
        %v663 = vld [vmem:[%s417 + $0x10] sm:$0xf]
        %v664 = vld [vmem:[%s417 + $0x14] sm:$0x1]
        %v665 = vld [vmem:[%s417 + $0x18] sm:$0xf]
        %v666 = vld [vmem:[%s417 + $0x1c] sm:$0x1]
        %v667 = vld [vmem:[%s417 + $0x20] sm:$0xf]
        %v668 = vld [vmem:[%s417 + $0x24] sm:$0x1]
        %v669 = vld [vmem:[%s417 + $0x28] sm:$0xf]
        %v670 = vld [vmem:[%s417 + $0x2c] sm:$0x1]
        %v671 = vld [vmem:[%s417 + $0x30] sm:$0xf]
        %v672 = vld [vmem:[%s417 + $0x34] sm:$0x1]
        %v673 = vld [vmem:[%s417 + $0x38] sm:$0xf]
        %v674 = vld [vmem:[%s417 + $0x3c] sm:$0x1]
        %vm675 = vsmask.f32 3328
        %vm676 = vsmask.f32 7440
        %vm677 = vmor %vm675, %vm676
        %v679 = vshrl.u32 %v659, 16
        %v681 = vrot.slane %v679, 4
        %v682 = vshll.u32 %v659, 16
        %v684 = vrot.slane %v682, 5
        %v685 = vor.u32 %v681, %v684
        %v686 = vrot.slane %v685, 4
        %v688 = vshll.u32 %v660, 16
        %v690 = vrot.slane %v688, 5
        %v691 = vsel %vm677, %v686, %v690
        %v693 = vshrl.u32 %v661, 16
        %v695 = vrot.slane %v693, 4
        %v696 = vshll.u32 %v661, 16
        %v698 = vrot.slane %v696, 5
        %v699 = vor.u32 %v695, %v698
        %v700 = vrot.slane %v699, 4
        %v702 = vshll.u32 %v662, 16
        %v704 = vrot.slane %v702, 5
        %v705 = vsel %vm677, %v700, %v704
        %v707 = vshrl.u32 %v663, 16
        %v709 = vrot.slane %v707, 4
        %v710 = vshll.u32 %v663, 16
        %v712 = vrot.slane %v710, 5
        %v713 = vor.u32 %v709, %v712
        %v714 = vrot.slane %v713, 4
        %v716 = vshll.u32 %v664, 16
        %v718 = vrot.slane %v716, 5
        %v719 = vsel %vm677, %v714, %v718
        %v721 = vshrl.u32 %v665, 16
        %v723 = vrot.slane %v721, 4
        %v724 = vshll.u32 %v665, 16
        %v726 = vrot.slane %v724, 5
        %v727 = vor.u32 %v723, %v726
        %v728 = vrot.slane %v727, 4
        %v730 = vshll.u32 %v666, 16
        %v732 = vrot.slane %v730, 5
        %v733 = vsel %vm677, %v728, %v732
        %v735 = vshrl.u32 %v667, 16
        %v737 = vrot.slane %v735, 4
        %v738 = vshll.u32 %v667, 16
        %v740 = vrot.slane %v738, 5
        %v741 = vor.u32 %v737, %v740
        %v742 = vrot.slane %v741, 4
        %v744 = vshll.u32 %v668, 16
        %v746 = vrot.slane %v744, 5
        %v747 = vsel %vm677, %v742, %v746
        %v749 = vshrl.u32 %v669, 16
        %v751 = vrot.slane %v749, 4
        %v752 = vshll.u32 %v669, 16
        %v754 = vrot.slane %v752, 5
        %v755 = vor.u32 %v751, %v754
        %v756 = vrot.slane %v755, 4
        %v758 = vshll.u32 %v670, 16
        %v760 = vrot.slane %v758, 5
        %v761 = vsel %vm677, %v756, %v760
        %v763 = vshrl.u32 %v671, 16
        %v765 = vrot.slane %v763, 4
        %v766 = vshll.u32 %v671, 16
        %v768 = vrot.slane %v766, 5
        %v769 = vor.u32 %v765, %v768
        %v770 = vrot.slane %v769, 4
        %v772 = vshll.u32 %v672, 16
        %v774 = vrot.slane %v772, 5
        %v775 = vsel %vm677, %v770, %v774
        %v777 = vshrl.u32 %v673, 16
        %v779 = vrot.slane %v777, 4
        %v780 = vshll.u32 %v673, 16
        %v782 = vrot.slane %v780, 5
        %v783 = vor.u32 %v779, %v782
        %v784 = vrot.slane %v783, 4
        %v786 = vshll.u32 %v674, 16
        %v788 = vrot.slane %v786, 5
        %v789 = vsel %vm677, %v784, %v788
        %s790 = scalar_lea.vmem %s422, 4
        %v791 = vld [vmem:[%s790] sm:$0x3]
        %v792 = vunpack.c.l.b16 %v691
        %v793 = vunpack.c.l.b16 %v705
        %v794 = vunpack.c.l.b16 %v719
        %v795 = vunpack.c.l.b16 %v733
        %v796 = vunpack.c.l.b16 %v747
        %v797 = vunpack.c.l.b16 %v761
        %v798 = vunpack.c.l.b16 %v775
        %v799 = vunpack.c.l.b16 %v789
        %v800 = vpack.c.b16 %v793, %v792
        %v801 = vpack.c.b16 %v795, %v794
        %v802 = vpack.c.b16 %v797, %v796
        %v803 = vpack.c.b16 %v799, %v798
        %v805 = vsel %vm483, %v800, 0
        %v808 = vsel %vm483, %v801, 0
        %v811 = vsel %vm483, %v802, 0
        %v814 = vsel %vm483, %v803, 0
        %v817 = vsel %vm496, %v791, 0
        %819 = vmatpush.bf16.msra.mxu0 0
        %820 = vmatpush.bf16.msra.mxu0 0
        %821 = vmatpush.bf16.msra.mxu0 0
        %822 = vmatpush.bf16.msra.mxu0 0
        %823 = vmatpush.bf16.msra.mxu0 0
        %824 = vmatpush.bf16.msra.mxu0 0
        %825 = vmatpush.bf16.msra.mxu0 0
        %826 = vmatpush.bf16.msra.mxu0 %v817
        %827 = vmatmul.bf16.gmra.mxu0 %v805
        %v828 = vpop.f32.mrf.mxu0
        %v829 = vadd.f32 0.0, %v828
        %v830 = vpop.f32.mrf.mxu0
        %v831 = vadd.f32 0.0, %v830
        %832 = vmatmul.bf16.gmra.mxu0 %v808
        %v833 = vpop.f32.mrf.mxu0
        %v834 = vadd.f32 0.0, %v833
        %v835 = vpop.f32.mrf.mxu0
        %v836 = vadd.f32 0.0, %v835
        %837 = vmatmul.bf16.gmra.mxu0 %v811
        %v838 = vpop.f32.mrf.mxu0
        %v839 = vadd.f32 0.0, %v838
        %v840 = vpop.f32.mrf.mxu0
        %v841 = vadd.f32 0.0, %v840
        %842 = vmatmul.bf16.gmra.mxu0 %v814
        %v843 = vpop.f32.mrf.mxu0
        %v844 = vadd.f32 0.0, %v843
        %v845 = vpop.f32.mrf.mxu0
        %v846 = vadd.f32 0.0, %v845
        %847 = vdwg.mxu0
        %v848 = vadd.f32 %v574, %v829
        %v849 = vadd.f32 %v576, %v831
        %v850 = vadd.f32 %v579, %v834
        %v851 = vadd.f32 %v581, %v836
        %v852 = vadd.f32 %v584, %v839
        %v853 = vadd.f32 %v586, %v841
        %v854 = vadd.f32 %v589, %v844
        %v855 = vadd.f32 %v591, %v846
        %s856 = scalar_lea.vmem %s432, 4
        %v857 = vld [vmem:[%s856] sm:$0x3]
        %v859 = vsel %vm496, %v857, 0
        %861 = vmatpush.bf16.msra.mxu0 0
        %862 = vmatpush.bf16.msra.mxu0 0
        %863 = vmatpush.bf16.msra.mxu0 0
        %864 = vmatpush.bf16.msra.mxu0 0
        %865 = vmatpush.bf16.msra.mxu0 0
        %866 = vmatpush.bf16.msra.mxu0 0
        %867 = vmatpush.bf16.msra.mxu0 0
        %868 = vmatpush.bf16.msra.mxu0 %v859
        %869 = vmatmul.bf16.gmra.mxu0 %v805
        %v870 = vpop.f32.mrf.mxu0
        %v871 = vadd.f32 0.0, %v870
        %v872 = vpop.f32.mrf.mxu0
        %v873 = vadd.f32 0.0, %v872
        %874 = vmatmul.bf16.gmra.mxu0 %v808
        %v875 = vpop.f32.mrf.mxu0
        %v876 = vadd.f32 0.0, %v875
        %v877 = vpop.f32.mrf.mxu0
        %v878 = vadd.f32 0.0, %v877
        %879 = vmatmul.bf16.gmra.mxu0 %v811
        %v880 = vpop.f32.mrf.mxu0
        %v881 = vadd.f32 0.0, %v880
        %v882 = vpop.f32.mrf.mxu0
        %v883 = vadd.f32 0.0, %v882
        %884 = vmatmul.bf16.gmra.mxu0 %v814
        %v885 = vpop.f32.mrf.mxu0
        %v886 = vadd.f32 0.0, %v885
        %v887 = vpop.f32.mrf.mxu0
        %v888 = vadd.f32 0.0, %v887
        %889 = vdwg.mxu0
        %v890 = vadd.f32 %v640, %v871
        %v891 = vadd.f32 %v642, %v873
        %v892 = vadd.f32 %v645, %v876
        %v893 = vadd.f32 %v647, %v878
        %v894 = vadd.f32 %v650, %v881
        %v895 = vadd.f32 %v652, %v883
        %v896 = vadd.f32 %v655, %v886
        %v897 = vadd.f32 %v657, %v888
        %s898 = scalar_lea.vmem %s417, 144
        %v899 = vld [vmem:[%s898] sm:$0xf]
        %v900 = vld [vmem:[%s898 + $0x8] sm:$0xf]
        %v901 = vld [vmem:[%s898 + $0x10] sm:$0xf]
        %v902 = vld [vmem:[%s898 + $0x18] sm:$0xf]
        %v903 = vld [vmem:[%s898 + $0x20] sm:$0xf]
        %v904 = vld [vmem:[%s898 + $0x28] sm:$0xf]
        %v905 = vld [vmem:[%s898 + $0x30] sm:$0xf]
        %v906 = vld [vmem:[%s898 + $0x38] sm:$0xf]
        %s907 = scalar_lea.vmem %s422, 6
        %v908 = vld [vmem:[%s907] sm:$0x3]
        %v917 = vunpack.c.l.b16 %v899
        %v918 = vunpack.c.l.b16 %v900
        %v919 = vunpack.c.l.b16 %v901
        %v920 = vunpack.c.l.b16 %v902
        %v921 = vunpack.c.l.b16 %v903
        %v922 = vunpack.c.l.b16 %v904
        %v923 = vunpack.c.l.b16 %v905
        %v924 = vunpack.c.l.b16 %v906
        %v925 = vpack.c.b16 %v918, %v917
        %v926 = vpack.c.b16 %v920, %v919
        %v927 = vpack.c.b16 %v922, %v921
        %v928 = vpack.c.b16 %v924, %v923
        %v930 = vsel %vm483, %v925, 0
        %v933 = vsel %vm483, %v926, 0
        %v936 = vsel %vm483, %v927, 0
        %v939 = vsel %vm483, %v928, 0
        %v942 = vsel %vm496, %v908, 0
        %944 = vmatpush.bf16.msra.mxu0 0
        %945 = vmatpush.bf16.msra.mxu0 0
        %946 = vmatpush.bf16.msra.mxu0 0
        %947 = vmatpush.bf16.msra.mxu0 0
        %948 = vmatpush.bf16.msra.mxu0 0
        %949 = vmatpush.bf16.msra.mxu0 0
        %950 = vmatpush.bf16.msra.mxu0 0
        %951 = vmatpush.bf16.msra.mxu0 %v942
        %952 = vmatmul.bf16.gmra.mxu0 %v930
        %v953 = vpop.f32.mrf.mxu0
        %v954 = vadd.f32 0.0, %v953
        %v955 = vpop.f32.mrf.mxu0
        %v956 = vadd.f32 0.0, %v955
        %957 = vmatmul.bf16.gmra.mxu0 %v933
        %v958 = vpop.f32.mrf.mxu0
        %v959 = vadd.f32 0.0, %v958
        %v960 = vpop.f32.mrf.mxu0
        %v961 = vadd.f32 0.0, %v960
        %962 = vmatmul.bf16.gmra.mxu0 %v936
        %v963 = vpop.f32.mrf.mxu0
        %v964 = vadd.f32 0.0, %v963
        %v965 = vpop.f32.mrf.mxu0
        %v966 = vadd.f32 0.0, %v965
        %967 = vmatmul.bf16.gmra.mxu0 %v939
        %v968 = vpop.f32.mrf.mxu0
        %v969 = vadd.f32 0.0, %v968
        %v970 = vpop.f32.mrf.mxu0
        %v971 = vadd.f32 0.0, %v970
        %972 = vdwg.mxu0
        %v973 = vadd.f32 %v848, %v954
        %v974 = vadd.f32 %v849, %v956
        %v975 = vadd.f32 %v850, %v959
        %v976 = vadd.f32 %v851, %v961
        %v977 = vadd.f32 %v852, %v964
        %v978 = vadd.f32 %v853, %v966
        %v979 = vadd.f32 %v854, %v969
        %v980 = vadd.f32 %v855, %v971
        %s981 = scalar_lea.vmem %s432, 6
        %v982 = vld [vmem:[%s981] sm:$0x3]
        %v984 = vsel %vm496, %v982, 0
        %986 = vmatpush.bf16.msra.mxu0 0
        %987 = vmatpush.bf16.msra.mxu0 0
        %988 = vmatpush.bf16.msra.mxu0 0
        %989 = vmatpush.bf16.msra.mxu0 0
        %990 = vmatpush.bf16.msra.mxu0 0
        %991 = vmatpush.bf16.msra.mxu0 0
        %992 = vmatpush.bf16.msra.mxu0 0
        %993 = vmatpush.bf16.msra.mxu0 %v984
        %994 = vmatmul.bf16.gmra.mxu0 %v930
        %v995 = vpop.f32.mrf.mxu0
        %v996 = vadd.f32 0.0, %v995
        %v997 = vpop.f32.mrf.mxu0
        %v998 = vadd.f32 0.0, %v997
        %999 = vmatmul.bf16.gmra.mxu0 %v933
        %v1000 = vpop.f32.mrf.mxu0
        %v1001 = vadd.f32 0.0, %v1000
        %v1002 = vpop.f32.mrf.mxu0
        %v1003 = vadd.f32 0.0, %v1002
        %1004 = vmatmul.bf16.gmra.mxu0 %v936
        %v1005 = vpop.f32.mrf.mxu0
        %v1006 = vadd.f32 0.0, %v1005
        %v1007 = vpop.f32.mrf.mxu0
        %v1008 = vadd.f32 0.0, %v1007
        %1009 = vmatmul.bf16.gmra.mxu0 %v939
        %v1010 = vpop.f32.mrf.mxu0
        %v1011 = vadd.f32 0.0, %v1010
        %v1012 = vpop.f32.mrf.mxu0
        %v1013 = vadd.f32 0.0, %v1012
        %1014 = vdwg.mxu0
        %v1015 = vadd.f32 %v890, %v996
        %v1016 = vadd.f32 %v891, %v998
        %v1017 = vadd.f32 %v892, %v1001
        %v1018 = vadd.f32 %v893, %v1003
        %v1019 = vadd.f32 %v894, %v1006
        %v1020 = vadd.f32 %v895, %v1008
        %v1021 = vadd.f32 %v896, %v1011
        %v1022 = vadd.f32 %v897, %v1013
        %s1023 = scalar_lea.vmem %s417, 216
        %v1024 = vld [vmem:[%s1023] sm:$0xf]
        %v1025 = vld [vmem:[%s1023 + $0x8] sm:$0xf]
        %v1026 = vld [vmem:[%s1023 + $0x10] sm:$0xf]
        %v1027 = vld [vmem:[%s1023 + $0x18] sm:$0xf]
        %v1028 = vld [vmem:[%s1023 + $0x20] sm:$0xf]
        %v1029 = vld [vmem:[%s1023 + $0x28] sm:$0xf]
        %v1030 = vld [vmem:[%s1023 + $0x30] sm:$0xf]
        %v1031 = vld [vmem:[%s1023 + $0x38] sm:$0xf]
        %s1032 = scalar_lea.vmem %s422, 8
        %v1033 = vld [vmem:[%s1032] sm:$0x3]
        %v1042 = vunpack.c.l.b16 %v1024
        %v1043 = vunpack.c.l.b16 %v1025
        %v1044 = vunpack.c.l.b16 %v1026
        %v1045 = vunpack.c.l.b16 %v1027
        %v1046 = vunpack.c.l.b16 %v1028
        %v1047 = vunpack.c.l.b16 %v1029
        %v1048 = vunpack.c.l.b16 %v1030
        %v1049 = vunpack.c.l.b16 %v1031
        %v1050 = vpack.c.b16 %v1043, %v1042
        %v1051 = vpack.c.b16 %v1045, %v1044
        %v1052 = vpack.c.b16 %v1047, %v1046
        %v1053 = vpack.c.b16 %v1049, %v1048
        %v1055 = vsel %vm483, %v1050, 0
        %v1058 = vsel %vm483, %v1051, 0
        %v1061 = vsel %vm483, %v1052, 0
        %v1064 = vsel %vm483, %v1053, 0
        %v1067 = vsel %vm496, %v1033, 0
        %1069 = vmatpush.bf16.msra.mxu0 0
        %1070 = vmatpush.bf16.msra.mxu0 0
        %1071 = vmatpush.bf16.msra.mxu0 0
        %1072 = vmatpush.bf16.msra.mxu0 0
        %1073 = vmatpush.bf16.msra.mxu0 0
        %1074 = vmatpush.bf16.msra.mxu0 0
        %1075 = vmatpush.bf16.msra.mxu0 0
        %1076 = vmatpush.bf16.msra.mxu0 %v1067
        %1077 = vmatmul.bf16.gmra.mxu0 %v1055
        %v1078 = vpop.f32.mrf.mxu0
        %v1079 = vadd.f32 0.0, %v1078
        %v1080 = vpop.f32.mrf.mxu0
        %v1081 = vadd.f32 0.0, %v1080
        %1082 = vmatmul.bf16.gmra.mxu0 %v1058
        %v1083 = vpop.f32.mrf.mxu0
        %v1084 = vadd.f32 0.0, %v1083
        %v1085 = vpop.f32.mrf.mxu0
        %v1086 = vadd.f32 0.0, %v1085
        %1087 = vmatmul.bf16.gmra.mxu0 %v1061
        %v1088 = vpop.f32.mrf.mxu0
        %v1089 = vadd.f32 0.0, %v1088
        %v1090 = vpop.f32.mrf.mxu0
        %v1091 = vadd.f32 0.0, %v1090
        %1092 = vmatmul.bf16.gmra.mxu0 %v1064
        %v1093 = vpop.f32.mrf.mxu0
        %v1094 = vadd.f32 0.0, %v1093
        %v1095 = vpop.f32.mrf.mxu0
        %v1096 = vadd.f32 0.0, %v1095
        %1097 = vdwg.mxu0
        %v1098 = vadd.f32 %v973, %v1079
        %v1099 = vadd.f32 %v974, %v1081
        %v1100 = vadd.f32 %v975, %v1084
        %v1101 = vadd.f32 %v976, %v1086
        %v1102 = vadd.f32 %v977, %v1089
        %v1103 = vadd.f32 %v978, %v1091
        %v1104 = vadd.f32 %v979, %v1094
        %v1105 = vadd.f32 %v980, %v1096
        %s1106 = scalar_lea.vmem %s432, 8
        %v1107 = vld [vmem:[%s1106] sm:$0x3]
        %v1109 = vsel %vm496, %v1107, 0
        %1111 = vmatpush.bf16.msra.mxu0 0
        %1112 = vmatpush.bf16.msra.mxu0 0
        %1113 = vmatpush.bf16.msra.mxu0 0
        %1114 = vmatpush.bf16.msra.mxu0 0
        %1115 = vmatpush.bf16.msra.mxu0 0
        %1116 = vmatpush.bf16.msra.mxu0 0
        %1117 = vmatpush.bf16.msra.mxu0 0
        %1118 = vmatpush.bf16.msra.mxu0 %v1109
        %1119 = vmatmul.bf16.gmra.mxu0 %v1055
        %v1120 = vpop.f32.mrf.mxu0
        %v1121 = vadd.f32 0.0, %v1120
        %v1122 = vpop.f32.mrf.mxu0
        %v1123 = vadd.f32 0.0, %v1122
        %1124 = vmatmul.bf16.gmra.mxu0 %v1058
        %v1125 = vpop.f32.mrf.mxu0
        %v1126 = vadd.f32 0.0, %v1125
        %v1127 = vpop.f32.mrf.mxu0
        %v1128 = vadd.f32 0.0, %v1127
        %1129 = vmatmul.bf16.gmra.mxu0 %v1061
        %v1130 = vpop.f32.mrf.mxu0
        %v1131 = vadd.f32 0.0, %v1130
        %v1132 = vpop.f32.mrf.mxu0
        %v1133 = vadd.f32 0.0, %v1132
        %1134 = vmatmul.bf16.gmra.mxu0 %v1064
        %v1135 = vpop.f32.mrf.mxu0
        %v1136 = vadd.f32 0.0, %v1135
        %v1137 = vpop.f32.mrf.mxu0
        %v1138 = vadd.f32 0.0, %v1137
        %1139 = vdwg.mxu0
        %v1140 = vadd.f32 %v1015, %v1121
        %v1141 = vadd.f32 %v1016, %v1123
        %v1142 = vadd.f32 %v1017, %v1126
        %v1143 = vadd.f32 %v1018, %v1128
        %v1144 = vadd.f32 %v1019, %v1131
        %v1145 = vadd.f32 %v1020, %v1133
        %v1146 = vadd.f32 %v1021, %v1136
        %v1147 = vadd.f32 %v1022, %v1138
        %v1148 = vld [vmem:[%s898] sm:$0xf]
        %v1149 = vld [vmem:[%s898 + $0x4] sm:$0x1]
        %v1150 = vld [vmem:[%s898 + $0x8] sm:$0xf]
        %v1151 = vld [vmem:[%s898 + $0xc] sm:$0x1]
        %v1152 = vld [vmem:[%s898 + $0x10] sm:$0xf]
        %v1153 = vld [vmem:[%s898 + $0x14] sm:$0x1]
        %v1154 = vld [vmem:[%s898 + $0x18] sm:$0xf]
        %v1155 = vld [vmem:[%s898 + $0x1c] sm:$0x1]
        %v1156 = vld [vmem:[%s898 + $0x20] sm:$0xf]
        %v1157 = vld [vmem:[%s898 + $0x24] sm:$0x1]
        %v1158 = vld [vmem:[%s898 + $0x28] sm:$0xf]
        %v1159 = vld [vmem:[%s898 + $0x2c] sm:$0x1]
        %v1160 = vld [vmem:[%s898 + $0x30] sm:$0xf]
        %v1161 = vld [vmem:[%s898 + $0x34] sm:$0x1]
        %v1162 = vld [vmem:[%s898 + $0x38] sm:$0xf]
        %v1163 = vld [vmem:[%s898 + $0x3c] sm:$0x1]
        %v1165 = vshrl.u32 %v1148, 16
        %v1167 = vrot.slane %v1165, 4
        %v1168 = vshll.u32 %v1148, 16
        %v1170 = vrot.slane %v1168, 5
        %v1171 = vor.u32 %v1167, %v1170
        %v1172 = vrot.slane %v1171, 4
        %v1174 = vshll.u32 %v1149, 16
        %v1176 = vrot.slane %v1174, 5
        %v1177 = vsel %vm677, %v1172, %v1176
        %v1179 = vshrl.u32 %v1150, 16
        %v1181 = vrot.slane %v1179, 4
        %v1182 = vshll.u32 %v1150, 16
        %v1184 = vrot.slane %v1182, 5
        %v1185 = vor.u32 %v1181, %v1184
        %v1186 = vrot.slane %v1185, 4
        %v1188 = vshll.u32 %v1151, 16
        %v1190 = vrot.slane %v1188, 5
        %v1191 = vsel %vm677, %v1186, %v1190
        %v1193 = vshrl.u32 %v1152, 16
        %v1195 = vrot.slane %v1193, 4
        %v1196 = vshll.u32 %v1152, 16
        %v1198 = vrot.slane %v1196, 5
        %v1199 = vor.u32 %v1195, %v1198
        %v1200 = vrot.slane %v1199, 4
        %v1202 = vshll.u32 %v1153, 16
        %v1204 = vrot.slane %v1202, 5
        %v1205 = vsel %vm677, %v1200, %v1204
        %v1207 = vshrl.u32 %v1154, 16
        %v1209 = vrot.slane %v1207, 4
        %v1210 = vshll.u32 %v1154, 16
        %v1212 = vrot.slane %v1210, 5
        %v1213 = vor.u32 %v1209, %v1212
        %v1214 = vrot.slane %v1213, 4
        %v1216 = vshll.u32 %v1155, 16
        %v1218 = vrot.slane %v1216, 5
        %v1219 = vsel %vm677, %v1214, %v1218
        %v1221 = vshrl.u32 %v1156, 16
        %v1223 = vrot.slane %v1221, 4
        %v1224 = vshll.u32 %v1156, 16
        %v1226 = vrot.slane %v1224, 5
        %v1227 = vor.u32 %v1223, %v1226
        %v1228 = vrot.slane %v1227, 4
        %v1230 = vshll.u32 %v1157, 16
        %v1232 = vrot.slane %v1230, 5
        %v1233 = vsel %vm677, %v1228, %v1232
        %v1235 = vshrl.u32 %v1158, 16
        %v1237 = vrot.slane %v1235, 4
        %v1238 = vshll.u32 %v1158, 16
        %v1240 = vrot.slane %v1238, 5
        %v1241 = vor.u32 %v1237, %v1240
        %v1242 = vrot.slane %v1241, 4
        %v1244 = vshll.u32 %v1159, 16
        %v1246 = vrot.slane %v1244, 5
        %v1247 = vsel %vm677, %v1242, %v1246
        %v1249 = vshrl.u32 %v1160, 16
        %v1251 = vrot.slane %v1249, 4
        %v1252 = vshll.u32 %v1160, 16
        %v1254 = vrot.slane %v1252, 5
        %v1255 = vor.u32 %v1251, %v1254
        %v1256 = vrot.slane %v1255, 4
        %v1258 = vshll.u32 %v1161, 16
        %v1260 = vrot.slane %v1258, 5
        %v1261 = vsel %vm677, %v1256, %v1260
        %v1263 = vshrl.u32 %v1162, 16
        %v1265 = vrot.slane %v1263, 4
        %v1266 = vshll.u32 %v1162, 16
        %v1268 = vrot.slane %v1266, 5
        %v1269 = vor.u32 %v1265, %v1268
        %v1270 = vrot.slane %v1269, 4
        %v1272 = vshll.u32 %v1163, 16
        %v1274 = vrot.slane %v1272, 5
        %v1275 = vsel %vm677, %v1270, %v1274
        %s1276 = scalar_lea.vmem %s422, 10
        %v1277 = vld [vmem:[%s1276] sm:$0x3]
        %v1278 = vunpack.c.l.b16 %v1177
        %v1279 = vunpack.c.l.b16 %v1191
        %v1280 = vunpack.c.l.b16 %v1205
        %v1281 = vunpack.c.l.b16 %v1219
        %v1282 = vunpack.c.l.b16 %v1233
        %v1283 = vunpack.c.l.b16 %v1247
        %v1284 = vunpack.c.l.b16 %v1261
        %v1285 = vunpack.c.l.b16 %v1275
        %v1286 = vpack.c.b16 %v1279, %v1278
        %v1287 = vpack.c.b16 %v1281, %v1280
        %v1288 = vpack.c.b16 %v1283, %v1282
        %v1289 = vpack.c.b16 %v1285, %v1284
        %v1291 = vsel %vm483, %v1286, 0
        %v1294 = vsel %vm483, %v1287, 0
        %v1297 = vsel %vm483, %v1288, 0
        %v1300 = vsel %vm483, %v1289, 0
        %v1303 = vsel %vm496, %v1277, 0
        %1305 = vmatpush.bf16.msra.mxu0 0
        %1306 = vmatpush.bf16.msra.mxu0 0
        %1307 = vmatpush.bf16.msra.mxu0 0
        %1308 = vmatpush.bf16.msra.mxu0 0
        %1309 = vmatpush.bf16.msra.mxu0 0
        %1310 = vmatpush.bf16.msra.mxu0 0
        %1311 = vmatpush.bf16.msra.mxu0 0
        %1312 = vmatpush.bf16.msra.mxu0 %v1303
        %1313 = vmatmul.bf16.gmra.mxu0 %v1291
        %v1314 = vpop.f32.mrf.mxu0
        %v1315 = vadd.f32 0.0, %v1314
        %v1316 = vpop.f32.mrf.mxu0
        %v1317 = vadd.f32 0.0, %v1316
        %1318 = vmatmul.bf16.gmra.mxu0 %v1294
        %v1319 = vpop.f32.mrf.mxu0
        %v1320 = vadd.f32 0.0, %v1319
        %v1321 = vpop.f32.mrf.mxu0
        %v1322 = vadd.f32 0.0, %v1321
        %1323 = vmatmul.bf16.gmra.mxu0 %v1297
        %v1324 = vpop.f32.mrf.mxu0
        %v1325 = vadd.f32 0.0, %v1324
        %v1326 = vpop.f32.mrf.mxu0
        %v1327 = vadd.f32 0.0, %v1326
        %1328 = vmatmul.bf16.gmra.mxu0 %v1300
        %v1329 = vpop.f32.mrf.mxu0
        %v1330 = vadd.f32 0.0, %v1329
        %v1331 = vpop.f32.mrf.mxu0
        %v1332 = vadd.f32 0.0, %v1331
        %1333 = vdwg.mxu0
        %v1334 = vadd.f32 %v1098, %v1315
        %v1335 = vadd.f32 %v1099, %v1317
        %v1336 = vadd.f32 %v1100, %v1320
        %v1337 = vadd.f32 %v1101, %v1322
        %v1338 = vadd.f32 %v1102, %v1325
        %v1339 = vadd.f32 %v1103, %v1327
        %v1340 = vadd.f32 %v1104, %v1330
        %v1341 = vadd.f32 %v1105, %v1332
        %s1342 = scalar_lea.vmem %s432, 10
        %v1343 = vld [vmem:[%s1342] sm:$0x3]
        %v1345 = vsel %vm496, %v1343, 0
        %1347 = vmatpush.bf16.msra.mxu0 0
        %1348 = vmatpush.bf16.msra.mxu0 0
        %1349 = vmatpush.bf16.msra.mxu0 0
        %1350 = vmatpush.bf16.msra.mxu0 0
        %1351 = vmatpush.bf16.msra.mxu0 0
        %1352 = vmatpush.bf16.msra.mxu0 0
        %1353 = vmatpush.bf16.msra.mxu0 0
        %1354 = vmatpush.bf16.msra.mxu0 %v1345
        %1355 = vmatmul.bf16.gmra.mxu0 %v1291
        %v1356 = vpop.f32.mrf.mxu0
        %v1357 = vadd.f32 0.0, %v1356
        %v1358 = vpop.f32.mrf.mxu0
        %v1359 = vadd.f32 0.0, %v1358
        %1360 = vmatmul.bf16.gmra.mxu0 %v1294
        %v1361 = vpop.f32.mrf.mxu0
        %v1362 = vadd.f32 0.0, %v1361
        %v1363 = vpop.f32.mrf.mxu0
        %v1364 = vadd.f32 0.0, %v1363
        %1365 = vmatmul.bf16.gmra.mxu0 %v1297
        %v1366 = vpop.f32.mrf.mxu0
        %v1367 = vadd.f32 0.0, %v1366
        %v1368 = vpop.f32.mrf.mxu0
        %v1369 = vadd.f32 0.0, %v1368
        %1370 = vmatmul.bf16.gmra.mxu0 %v1300
        %v1371 = vpop.f32.mrf.mxu0
        %v1372 = vadd.f32 0.0, %v1371
        %v1373 = vpop.f32.mrf.mxu0
        %v1374 = vadd.f32 0.0, %v1373
        %1375 = vdwg.mxu0
        %v1376 = vadd.f32 %v1140, %v1357
        %v1377 = vadd.f32 %v1141, %v1359
        %v1378 = vadd.f32 %v1142, %v1362
        %v1379 = vadd.f32 %v1143, %v1364
        %v1380 = vadd.f32 %v1144, %v1367
        %v1381 = vadd.f32 %v1145, %v1369
        %v1382 = vadd.f32 %v1146, %v1372
        %v1383 = vadd.f32 %v1147, %v1374
        %s1384 = scalar_lea.vmem %s417, 8
        %v1385 = vld [vmem:[%s1384] sm:$0xf]
        %v1386 = vld [vmem:[%s1384 + $0x8] sm:$0xf]
        %v1387 = vld [vmem:[%s1384 + $0x10] sm:$0xf]
        %v1388 = vld [vmem:[%s1384 + $0x18] sm:$0xf]
        %v1389 = vld [vmem:[%s1384 + $0x20] sm:$0xf]
        %v1390 = vld [vmem:[%s1384 + $0x28] sm:$0xf]
        %v1391 = vld [vmem:[%s1384 + $0x30] sm:$0xf]
        %v1392 = vld [vmem:[%s1384 + $0x38] sm:$0xf]
        %s1393 = scalar_lea.vmem %s422, 12
        %v1394 = vld [vmem:[%s1393] sm:$0x3]
        %v1403 = vunpack.c.l.b16 %v1385
        %v1404 = vunpack.c.l.b16 %v1386
        %v1405 = vunpack.c.l.b16 %v1387
        %v1406 = vunpack.c.l.b16 %v1388
        %v1407 = vunpack.c.l.b16 %v1389
        %v1408 = vunpack.c.l.b16 %v1390
        %v1409 = vunpack.c.l.b16 %v1391
        %v1410 = vunpack.c.l.b16 %v1392
        %v1411 = vpack.c.b16 %v1404, %v1403
        %v1412 = vpack.c.b16 %v1406, %v1405
        %v1413 = vpack.c.b16 %v1408, %v1407
        %v1414 = vpack.c.b16 %v1410, %v1409
        %v1416 = vsel %vm483, %v1411, 0
        %v1419 = vsel %vm483, %v1412, 0
        %v1422 = vsel %vm483, %v1413, 0
        %v1425 = vsel %vm483, %v1414, 0
        %v1428 = vsel %vm496, %v1394, 0
        %1430 = vmatpush.bf16.msra.mxu0 0
        %1431 = vmatpush.bf16.msra.mxu0 0
        %1432 = vmatpush.bf16.msra.mxu0 0
        %1433 = vmatpush.bf16.msra.mxu0 0
        %1434 = vmatpush.bf16.msra.mxu0 0
        %1435 = vmatpush.bf16.msra.mxu0 0
        %1436 = vmatpush.bf16.msra.mxu0 0
        %1437 = vmatpush.bf16.msra.mxu0 %v1428
        %1438 = vmatmul.bf16.gmra.mxu0 %v1416
        %v1439 = vpop.f32.mrf.mxu0
        %v1440 = vadd.f32 0.0, %v1439
        %v1441 = vpop.f32.mrf.mxu0
        %v1442 = vadd.f32 0.0, %v1441
        %1443 = vmatmul.bf16.gmra.mxu0 %v1419
        %v1444 = vpop.f32.mrf.mxu0
        %v1445 = vadd.f32 0.0, %v1444
        %v1446 = vpop.f32.mrf.mxu0
        %v1447 = vadd.f32 0.0, %v1446
        %1448 = vmatmul.bf16.gmra.mxu0 %v1422
        %v1449 = vpop.f32.mrf.mxu0
        %v1450 = vadd.f32 0.0, %v1449
        %v1451 = vpop.f32.mrf.mxu0
        %v1452 = vadd.f32 0.0, %v1451
        %1453 = vmatmul.bf16.gmra.mxu0 %v1425
        %v1454 = vpop.f32.mrf.mxu0
        %v1455 = vadd.f32 0.0, %v1454
        %v1456 = vpop.f32.mrf.mxu0
        %v1457 = vadd.f32 0.0, %v1456
        %1458 = vdwg.mxu0
        %v1459 = vadd.f32 %v1334, %v1440
        %v1460 = vadd.f32 %v1335, %v1442
        %v1461 = vadd.f32 %v1336, %v1445
        %v1462 = vadd.f32 %v1337, %v1447
        %v1463 = vadd.f32 %v1338, %v1450
        %v1464 = vadd.f32 %v1339, %v1452
        %v1465 = vadd.f32 %v1340, %v1455
        %v1466 = vadd.f32 %v1341, %v1457
        %s1467 = scalar_lea.vmem %s432, 12
        %v1468 = vld [vmem:[%s1467] sm:$0x3]
        %v1470 = vsel %vm496, %v1468, 0
        %1472 = vmatpush.bf16.msra.mxu0 0
        %1473 = vmatpush.bf16.msra.mxu0 0
        %1474 = vmatpush.bf16.msra.mxu0 0
        %1475 = vmatpush.bf16.msra.mxu0 0
        %1476 = vmatpush.bf16.msra.mxu0 0
        %1477 = vmatpush.bf16.msra.mxu0 0
        %1478 = vmatpush.bf16.msra.mxu0 0
        %1479 = vmatpush.bf16.msra.mxu0 %v1470
        %1480 = vmatmul.bf16.gmra.mxu0 %v1416
        %v1481 = vpop.f32.mrf.mxu0
        %v1482 = vadd.f32 0.0, %v1481
        %v1483 = vpop.f32.mrf.mxu0
        %v1484 = vadd.f32 0.0, %v1483
        %1485 = vmatmul.bf16.gmra.mxu0 %v1419
        %v1486 = vpop.f32.mrf.mxu0
        %v1487 = vadd.f32 0.0, %v1486
        %v1488 = vpop.f32.mrf.mxu0
        %v1489 = vadd.f32 0.0, %v1488
        %1490 = vmatmul.bf16.gmra.mxu0 %v1422
        %v1491 = vpop.f32.mrf.mxu0
        %v1492 = vadd.f32 0.0, %v1491
        %v1493 = vpop.f32.mrf.mxu0
        %v1494 = vadd.f32 0.0, %v1493
        %1495 = vmatmul.bf16.gmra.mxu0 %v1425
        %v1496 = vpop.f32.mrf.mxu0
        %v1497 = vadd.f32 0.0, %v1496
        %v1498 = vpop.f32.mrf.mxu0
        %v1499 = vadd.f32 0.0, %v1498
        %1500 = vdwg.mxu0
        %v1501 = vadd.f32 %v1376, %v1482
        %v1502 = vadd.f32 %v1377, %v1484
        %v1503 = vadd.f32 %v1378, %v1487
        %v1504 = vadd.f32 %v1379, %v1489
        %v1505 = vadd.f32 %v1380, %v1492
        %v1506 = vadd.f32 %v1381, %v1494
        %v1507 = vadd.f32 %v1382, %v1497
        %v1508 = vadd.f32 %v1383, %v1499
        %s1509 = scalar_lea.vmem %s417, 80
        %v1510 = vld [vmem:[%s1509] sm:$0xf]
        %v1511 = vld [vmem:[%s1509 + $0x8] sm:$0xf]
        %v1512 = vld [vmem:[%s1509 + $0x10] sm:$0xf]
        %v1513 = vld [vmem:[%s1509 + $0x18] sm:$0xf]
        %v1514 = vld [vmem:[%s1509 + $0x20] sm:$0xf]
        %v1515 = vld [vmem:[%s1509 + $0x28] sm:$0xf]
        %v1516 = vld [vmem:[%s1509 + $0x30] sm:$0xf]
        %v1517 = vld [vmem:[%s1509 + $0x38] sm:$0xf]
        %s1518 = scalar_lea.vmem %s422, 14
        %v1519 = vld [vmem:[%s1518] sm:$0x3]
        %v1528 = vunpack.c.l.b16 %v1510
        %v1529 = vunpack.c.l.b16 %v1511
        %v1530 = vunpack.c.l.b16 %v1512
        %v1531 = vunpack.c.l.b16 %v1513
        %v1532 = vunpack.c.l.b16 %v1514
        %v1533 = vunpack.c.l.b16 %v1515
        %v1534 = vunpack.c.l.b16 %v1516
        %v1535 = vunpack.c.l.b16 %v1517
        %v1536 = vpack.c.b16 %v1529, %v1528
        %v1537 = vpack.c.b16 %v1531, %v1530
        %v1538 = vpack.c.b16 %v1533, %v1532
        %v1539 = vpack.c.b16 %v1535, %v1534
        %v1541 = vsel %vm483, %v1536, 0
        %v1544 = vsel %vm483, %v1537, 0
        %v1547 = vsel %vm483, %v1538, 0
        %v1550 = vsel %vm483, %v1539, 0
        %v1553 = vsel %vm496, %v1519, 0
        %1555 = vmatpush.bf16.msra.mxu0 0
        %1556 = vmatpush.bf16.msra.mxu0 0
        %1557 = vmatpush.bf16.msra.mxu0 0
        %1558 = vmatpush.bf16.msra.mxu0 0
        %1559 = vmatpush.bf16.msra.mxu0 0
        %1560 = vmatpush.bf16.msra.mxu0 0
        %1561 = vmatpush.bf16.msra.mxu0 0
        %1562 = vmatpush.bf16.msra.mxu0 %v1553
        %1563 = vmatmul.bf16.gmra.mxu0 %v1541
        %v1564 = vpop.f32.mrf.mxu0
        %v1565 = vadd.f32 0.0, %v1564
        %v1566 = vpop.f32.mrf.mxu0
        %v1567 = vadd.f32 0.0, %v1566
        %1568 = vmatmul.bf16.gmra.mxu0 %v1544
        %v1569 = vpop.f32.mrf.mxu0
        %v1570 = vadd.f32 0.0, %v1569
        %v1571 = vpop.f32.mrf.mxu0
        %v1572 = vadd.f32 0.0, %v1571
        %1573 = vmatmul.bf16.gmra.mxu0 %v1547
        %v1574 = vpop.f32.mrf.mxu0
        %v1575 = vadd.f32 0.0, %v1574
        %v1576 = vpop.f32.mrf.mxu0
        %v1577 = vadd.f32 0.0, %v1576
        %1578 = vmatmul.bf16.gmra.mxu0 %v1550
        %v1579 = vpop.f32.mrf.mxu0
        %v1580 = vadd.f32 0.0, %v1579
        %v1581 = vpop.f32.mrf.mxu0
        %v1582 = vadd.f32 0.0, %v1581
        %1583 = vdwg.mxu0
        %v1584 = vadd.f32 %v1459, %v1565
        %v1585 = vadd.f32 %v1460, %v1567
        %v1586 = vadd.f32 %v1461, %v1570
        %v1587 = vadd.f32 %v1462, %v1572
        %v1588 = vadd.f32 %v1463, %v1575
        %v1589 = vadd.f32 %v1464, %v1577
        %v1590 = vadd.f32 %v1465, %v1580
        %v1591 = vadd.f32 %v1466, %v1582
        %s1592 = scalar_lea.vmem %s432, 14
        %v1593 = vld [vmem:[%s1592] sm:$0x3]
        %v1595 = vsel %vm496, %v1593, 0
        %1597 = vmatpush.bf16.msra.mxu0 0
        %1598 = vmatpush.bf16.msra.mxu0 0
        %1599 = vmatpush.bf16.msra.mxu0 0
        %1600 = vmatpush.bf16.msra.mxu0 0
        %1601 = vmatpush.bf16.msra.mxu0 0
        %1602 = vmatpush.bf16.msra.mxu0 0
        %1603 = vmatpush.bf16.msra.mxu0 0
        %1604 = vmatpush.bf16.msra.mxu0 %v1595
        %1605 = vmatmul.bf16.gmra.mxu0 %v1541
        %v1606 = vpop.f32.mrf.mxu0
        %v1607 = vadd.f32 0.0, %v1606
        %v1608 = vpop.f32.mrf.mxu0
        %v1609 = vadd.f32 0.0, %v1608
        %1610 = vmatmul.bf16.gmra.mxu0 %v1544
        %v1611 = vpop.f32.mrf.mxu0
        %v1612 = vadd.f32 0.0, %v1611
        %v1613 = vpop.f32.mrf.mxu0
        %v1614 = vadd.f32 0.0, %v1613
        %1615 = vmatmul.bf16.gmra.mxu0 %v1547
        %v1616 = vpop.f32.mrf.mxu0
        %v1617 = vadd.f32 0.0, %v1616
        %v1618 = vpop.f32.mrf.mxu0
        %v1619 = vadd.f32 0.0, %v1618
        %1620 = vmatmul.bf16.gmra.mxu0 %v1550
        %v1621 = vpop.f32.mrf.mxu0
        %v1622 = vadd.f32 0.0, %v1621
        %v1623 = vpop.f32.mrf.mxu0
        %v1624 = vadd.f32 0.0, %v1623
        %1625 = vdwg.mxu0
        %v1626 = vadd.f32 %v1501, %v1607
        %v1627 = vadd.f32 %v1502, %v1609
        %v1628 = vadd.f32 %v1503, %v1612
        %v1629 = vadd.f32 %v1504, %v1614
        %v1630 = vadd.f32 %v1505, %v1617
        %v1631 = vadd.f32 %v1506, %v1619
        %v1632 = vadd.f32 %v1507, %v1622
        %v1633 = vadd.f32 %v1508, %v1624
        %v1634 = vld [vmem:[%s1384] sm:$0xf]
        %v1635 = vld [vmem:[%s1384 + $0x4] sm:$0x1]
        %v1636 = vld [vmem:[%s1384 + $0x8] sm:$0xf]
        %v1637 = vld [vmem:[%s1384 + $0xc] sm:$0x1]
        %v1638 = vld [vmem:[%s1384 + $0x10] sm:$0xf]
        %v1639 = vld [vmem:[%s1384 + $0x14] sm:$0x1]
        %v1640 = vld [vmem:[%s1384 + $0x18] sm:$0xf]
        %v1641 = vld [vmem:[%s1384 + $0x1c] sm:$0x1]
        %v1642 = vld [vmem:[%s1384 + $0x20] sm:$0xf]
        %v1643 = vld [vmem:[%s1384 + $0x24] sm:$0x1]
        %v1644 = vld [vmem:[%s1384 + $0x28] sm:$0xf]
        %v1645 = vld [vmem:[%s1384 + $0x2c] sm:$0x1]
        %v1646 = vld [vmem:[%s1384 + $0x30] sm:$0xf]
        %v1647 = vld [vmem:[%s1384 + $0x34] sm:$0x1]
        %v1648 = vld [vmem:[%s1384 + $0x38] sm:$0xf]
        %v1649 = vld [vmem:[%s1384 + $0x3c] sm:$0x1]
        %v1651 = vshrl.u32 %v1634, 16
        %v1653 = vrot.slane %v1651, 4
        %v1654 = vshll.u32 %v1634, 16
        %v1656 = vrot.slane %v1654, 5
        %v1657 = vor.u32 %v1653, %v1656
        %v1658 = vrot.slane %v1657, 4
        %v1660 = vshll.u32 %v1635, 16
        %v1662 = vrot.slane %v1660, 5
        %v1663 = vsel %vm677, %v1658, %v1662
        %v1665 = vshrl.u32 %v1636, 16
        %v1667 = vrot.slane %v1665, 4
        %v1668 = vshll.u32 %v1636, 16
        %v1670 = vrot.slane %v1668, 5
        %v1671 = vor.u32 %v1667, %v1670
        %v1672 = vrot.slane %v1671, 4
        %v1674 = vshll.u32 %v1637, 16
        %v1676 = vrot.slane %v1674, 5
        %v1677 = vsel %vm677, %v1672, %v1676
        %v1679 = vshrl.u32 %v1638, 16
        %v1681 = vrot.slane %v1679, 4
        %v1682 = vshll.u32 %v1638, 16
        %v1684 = vrot.slane %v1682, 5
        %v1685 = vor.u32 %v1681, %v1684
        %v1686 = vrot.slane %v1685, 4
        %v1688 = vshll.u32 %v1639, 16
        %v1690 = vrot.slane %v1688, 5
        %v1691 = vsel %vm677, %v1686, %v1690
        %v1693 = vshrl.u32 %v1640, 16
        %v1695 = vrot.slane %v1693, 4
        %v1696 = vshll.u32 %v1640, 16
        %v1698 = vrot.slane %v1696, 5
        %v1699 = vor.u32 %v1695, %v1698
        %v1700 = vrot.slane %v1699, 4
        %v1702 = vshll.u32 %v1641, 16
        %v1704 = vrot.slane %v1702, 5
        %v1705 = vsel %vm677, %v1700, %v1704
        %v1707 = vshrl.u32 %v1642, 16
        %v1709 = vrot.slane %v1707, 4
        %v1710 = vshll.u32 %v1642, 16
        %v1712 = vrot.slane %v1710, 5
        %v1713 = vor.u32 %v1709, %v1712
        %v1714 = vrot.slane %v1713, 4
        %v1716 = vshll.u32 %v1643, 16
        %v1718 = vrot.slane %v1716, 5
        %v1719 = vsel %vm677, %v1714, %v1718
        %v1721 = vshrl.u32 %v1644, 16
        %v1723 = vrot.slane %v1721, 4
        %v1724 = vshll.u32 %v1644, 16
        %v1726 = vrot.slane %v1724, 5
        %v1727 = vor.u32 %v1723, %v1726
        %v1728 = vrot.slane %v1727, 4
        %v1730 = vshll.u32 %v1645, 16
        %v1732 = vrot.slane %v1730, 5
        %v1733 = vsel %vm677, %v1728, %v1732
        %v1735 = vshrl.u32 %v1646, 16
        %v1737 = vrot.slane %v1735, 4
        %v1738 = vshll.u32 %v1646, 16
        %v1740 = vrot.slane %v1738, 5
        %v1741 = vor.u32 %v1737, %v1740
        %v1742 = vrot.slane %v1741, 4
        %v1744 = vshll.u32 %v1647, 16
        %v1746 = vrot.slane %v1744, 5
        %v1747 = vsel %vm677, %v1742, %v1746
        %v1749 = vshrl.u32 %v1648, 16
        %v1751 = vrot.slane %v1749, 4
        %v1752 = vshll.u32 %v1648, 16
        %v1754 = vrot.slane %v1752, 5
        %v1755 = vor.u32 %v1751, %v1754
        %v1756 = vrot.slane %v1755, 4
        %v1758 = vshll.u32 %v1649, 16
        %v1760 = vrot.slane %v1758, 5
        %v1761 = vsel %vm677, %v1756, %v1760
        %s1762 = scalar_lea.vmem %s422, 16
        %v1763 = vld [vmem:[%s1762] sm:$0x3]
        %v1764 = vunpack.c.l.b16 %v1663
        %v1765 = vunpack.c.l.b16 %v1677
        %v1766 = vunpack.c.l.b16 %v1691
        %v1767 = vunpack.c.l.b16 %v1705
        %v1768 = vunpack.c.l.b16 %v1719
        %v1769 = vunpack.c.l.b16 %v1733
        %v1770 = vunpack.c.l.b16 %v1747
        %v1771 = vunpack.c.l.b16 %v1761
        %v1772 = vpack.c.b16 %v1765, %v1764
        %v1773 = vpack.c.b16 %v1767, %v1766
        %v1774 = vpack.c.b16 %v1769, %v1768
        %v1775 = vpack.c.b16 %v1771, %v1770
        %v1777 = vsel %vm483, %v1772, 0
        %v1780 = vsel %vm483, %v1773, 0
        %v1783 = vsel %vm483, %v1774, 0
        %v1786 = vsel %vm483, %v1775, 0
        %v1789 = vsel %vm496, %v1763, 0
        %1791 = vmatpush.bf16.msra.mxu0 0
        %1792 = vmatpush.bf16.msra.mxu0 0
        %1793 = vmatpush.bf16.msra.mxu0 0
        %1794 = vmatpush.bf16.msra.mxu0 0
        %1795 = vmatpush.bf16.msra.mxu0 0
        %1796 = vmatpush.bf16.msra.mxu0 0
        %1797 = vmatpush.bf16.msra.mxu0 0
        %1798 = vmatpush.bf16.msra.mxu0 %v1789
        %1799 = vmatmul.bf16.gmra.mxu0 %v1777
        %v1800 = vpop.f32.mrf.mxu0
        %v1801 = vadd.f32 0.0, %v1800
        %v1802 = vpop.f32.mrf.mxu0
        %v1803 = vadd.f32 0.0, %v1802
        %1804 = vmatmul.bf16.gmra.mxu0 %v1780
        %v1805 = vpop.f32.mrf.mxu0
        %v1806 = vadd.f32 0.0, %v1805
        %v1807 = vpop.f32.mrf.mxu0
        %v1808 = vadd.f32 0.0, %v1807
        %1809 = vmatmul.bf16.gmra.mxu0 %v1783
        %v1810 = vpop.f32.mrf.mxu0
        %v1811 = vadd.f32 0.0, %v1810
        %v1812 = vpop.f32.mrf.mxu0
        %v1813 = vadd.f32 0.0, %v1812
        %1814 = vmatmul.bf16.gmra.mxu0 %v1786
        %v1815 = vpop.f32.mrf.mxu0
        %v1816 = vadd.f32 0.0, %v1815
        %v1817 = vpop.f32.mrf.mxu0
        %v1818 = vadd.f32 0.0, %v1817
        %1819 = vdwg.mxu0
        %v1820 = vadd.f32 %v1584, %v1801
        %v1821 = vadd.f32 %v1585, %v1803
        %v1822 = vadd.f32 %v1586, %v1806
        %v1823 = vadd.f32 %v1587, %v1808
        %v1824 = vadd.f32 %v1588, %v1811
        %v1825 = vadd.f32 %v1589, %v1813
        %v1826 = vadd.f32 %v1590, %v1816
        %v1827 = vadd.f32 %v1591, %v1818
        %s1828 = scalar_lea.vmem %s432, 16
        %v1829 = vld [vmem:[%s1828] sm:$0x3]
        %v1831 = vsel %vm496, %v1829, 0
        %1833 = vmatpush.bf16.msra.mxu0 0
        %1834 = vmatpush.bf16.msra.mxu0 0
        %1835 = vmatpush.bf16.msra.mxu0 0
        %1836 = vmatpush.bf16.msra.mxu0 0
        %1837 = vmatpush.bf16.msra.mxu0 0
        %1838 = vmatpush.bf16.msra.mxu0 0
        %1839 = vmatpush.bf16.msra.mxu0 0
        %1840 = vmatpush.bf16.msra.mxu0 %v1831
        %1841 = vmatmul.bf16.gmra.mxu0 %v1777
        %v1842 = vpop.f32.mrf.mxu0
        %v1843 = vadd.f32 0.0, %v1842
        %v1844 = vpop.f32.mrf.mxu0
        %v1845 = vadd.f32 0.0, %v1844
        %1846 = vmatmul.bf16.gmra.mxu0 %v1780
        %v1847 = vpop.f32.mrf.mxu0
        %v1848 = vadd.f32 0.0, %v1847
        %v1849 = vpop.f32.mrf.mxu0
        %v1850 = vadd.f32 0.0, %v1849
        %1851 = vmatmul.bf16.gmra.mxu0 %v1783
        %v1852 = vpop.f32.mrf.mxu0
        %v1853 = vadd.f32 0.0, %v1852
        %v1854 = vpop.f32.mrf.mxu0
        %v1855 = vadd.f32 0.0, %v1854
        %1856 = vmatmul.bf16.gmra.mxu0 %v1786
        %v1857 = vpop.f32.mrf.mxu0
        %v1858 = vadd.f32 0.0, %v1857
        %v1859 = vpop.f32.mrf.mxu0
        %v1860 = vadd.f32 0.0, %v1859
        %1861 = vdwg.mxu0
        %v1862 = vadd.f32 %v1626, %v1843
        %v1863 = vadd.f32 %v1627, %v1845
        %v1864 = vadd.f32 %v1628, %v1848
        %v1865 = vadd.f32 %v1629, %v1850
        %v1866 = vadd.f32 %v1630, %v1853
        %v1867 = vadd.f32 %v1631, %v1855
        %v1868 = vadd.f32 %v1632, %v1858
        %v1869 = vadd.f32 %v1633, %v1860
        %v1870 = vld [vmem:[%s425] sm:$0x1]
        %v1872 = vperm.slane %v1870, 0
        %v1874 = vmul.f32 %v1820, %v1872
        %v1875 = vmul.f32 %v1821, %v1872
        %v1876 = vmul.f32 %v1822, %v1872
        %v1877 = vmul.f32 %v1823, %v1872
        %v1878 = vmul.f32 %v1824, %v1872
        %v1879 = vmul.f32 %v1825, %v1872
        %v1880 = vmul.f32 %v1826, %v1872
        %v1881 = vmul.f32 %v1827, %v1872
        %v1882 = vld [vmem:[%s428] sm:$0x1]
        %v1884 = vperm.slane %v1882, 0
        %v1886 = vadd.f32 %v1874, %v1884
        %v1887 = vadd.f32 %v1875, %v1884
        %v1888 = vadd.f32 %v1876, %v1884
        %v1889 = vadd.f32 %v1877, %v1884
        %v1890 = vadd.f32 %v1878, %v1884
        %v1891 = vadd.f32 %v1879, %v1884
        %v1892 = vadd.f32 %v1880, %v1884
        %v1893 = vadd.f32 %v1881, %v1884
        %v1894 = vmax.f32 %v1886, 0.0
        %v1895 = vmax.f32 %v1887, 0.0
        %v1896 = vmax.f32 %v1888, 0.0
        %v1897 = vmax.f32 %v1889, 0.0
        %v1898 = vmax.f32 %v1890, 0.0
        %v1899 = vmax.f32 %v1891, 0.0
        %v1900 = vmax.f32 %v1892, 0.0
        %v1901 = vmax.f32 %v1893, 0.0
        %v1902 = vpack.c.bf16 %v1894, %v1894
        %v1903 = vpack.c.bf16 %v1895, %v1895
        %v1904 = vpack.c.bf16 %v1896, %v1896
        %v1905 = vpack.c.bf16 %v1897, %v1897
        %v1906 = vpack.c.bf16 %v1898, %v1898
        %v1907 = vpack.c.bf16 %v1899, %v1899
        %v1908 = vpack.c.bf16 %v1900, %v1900
        %v1909 = vpack.c.bf16 %v1901, %v1901
        %vm1910 = vcmask 60416
        %1911 = vst.msk [vmem:[%s404] sm:$0xf] %vm1910, %v1902
        %1912 = vst.msk [vmem:[%s404 + $0x4] sm:$0xf] %vm1910, %v1903
        %1913 = vst.msk [vmem:[%s404 + $0x8] sm:$0xf] %vm1910, %v1904
        %1914 = vst.msk [vmem:[%s404 + $0xc] sm:$0xf] %vm1910, %v1905
        %1915 = vst.msk [vmem:[%s404 + $0x10] sm:$0xf] %vm1910, %v1906
        %1916 = vst.msk [vmem:[%s404 + $0x14] sm:$0xf] %vm1910, %v1907
        %1917 = vst.msk [vmem:[%s404 + $0x18] sm:$0xf] %vm1910, %v1908
        %1918 = vst.msk [vmem:[%s404 + $0x1c] sm:$0xf] %vm1910, %v1909
        %v1919 = vld [vmem:[%s435] sm:$0x1]
        %v1921 = vperm.slane %v1919, 0
        %v1923 = vmul.f32 %v1862, %v1921
        %v1924 = vmul.f32 %v1863, %v1921
        %v1925 = vmul.f32 %v1864, %v1921
        %v1926 = vmul.f32 %v1865, %v1921
        %v1927 = vmul.f32 %v1866, %v1921
        %v1928 = vmul.f32 %v1867, %v1921
        %v1929 = vmul.f32 %v1868, %v1921
        %v1930 = vmul.f32 %v1869, %v1921
        %v1931 = vld [vmem:[%s438] sm:$0x1]
        %v1933 = vperm.slane %v1931, 0
        %v1935 = vadd.f32 %v1923, %v1933
        %v1936 = vadd.f32 %v1924, %v1933
        %v1937 = vadd.f32 %v1925, %v1933
        %v1938 = vadd.f32 %v1926, %v1933
        %v1939 = vadd.f32 %v1927, %v1933
        %v1940 = vadd.f32 %v1928, %v1933
        %v1941 = vadd.f32 %v1929, %v1933
        %v1942 = vadd.f32 %v1930, %v1933
        %v1943 = vpack.c.bf16 %v1935, %v1935
        %v1944 = vpack.c.bf16 %v1936, %v1936
        %v1945 = vpack.c.bf16 %v1937, %v1937
        %v1946 = vpack.c.bf16 %v1938, %v1938
        %v1947 = vpack.c.bf16 %v1939, %v1939
        %v1948 = vpack.c.bf16 %v1940, %v1940
        %v1949 = vpack.c.bf16 %v1941, %v1941
        %v1950 = vpack.c.bf16 %v1942, %v1942
        %1951 = vst.msk [vmem:[%s411] sm:$0xf] %vm1910, %v1943
        %1952 = vst.msk [vmem:[%s411 + $0x4] sm:$0xf] %vm1910, %v1944
        %1953 = vst.msk [vmem:[%s411 + $0x8] sm:$0xf] %vm1910, %v1945
        %1954 = vst.msk [vmem:[%s411 + $0xc] sm:$0xf] %vm1910, %v1946
        %1955 = vst.msk [vmem:[%s411 + $0x10] sm:$0xf] %vm1910, %v1947
        %1956 = vst.msk [vmem:[%s411 + $0x14] sm:$0xf] %vm1910, %v1948
        %1957 = vst.msk [vmem:[%s411 + $0x18] sm:$0xf] %vm1910, %v1949
        %1958 = vst.msk [vmem:[%s411 + $0x1c] sm:$0xf] %vm1910, %v1950
        %s1959 = sand.u32 %s241, 1
        %s1960 = scalar_lea.sflag [#allocation3], %s1959
        %s1961 = sand.u32 %s241, 1
        %s1962 = smul.addr %s1961, 32
        %s1963 = scalar_lea.vmem [#allocation2], %s1962
        %s1964 = sand.u32 %s271, 1
        %s1965 = scalar_lea.sflag [#allocation5], %s1964
        %s1966 = sand.u32 %s271, 1
        %s1967 = smul.addr %s1966, 32
        %s1968 = scalar_lea.vmem [#allocation4], %s1967
        // Predicated region
        $region49: #{tpu_custom_call.1} parent=47 // pred_check
          %p1969 = pneg %p251
        $region50: #{tpu_custom_call.1} parent=47 // pred_check_branch
          %1971 = sbr.rel (%p1969) target = $region52
        $region51: #{tpu_custom_call.1} parent=47 // pred_region
          %s1972 = smul.u32 8, %s32
          %1974 = vsyncadd %s1960, 0
          %s1975 = sadd.s32 %s33, %s1972
          %s1976 = smul.addr %s31, 8
          %s1977 = sadd.s32 %s1975, %s1976
          %s1978 = smul.addr %s1977, 4
          %s1979 = scalar_lea.hbm %s7, %s1978
          %s1980 = sshll.u32 %s1963, 4
          %s1981 = int_to_ptr.vmem [resolvable:$true] %s1980
          %s1982 = sshll.u32 %s1979, 4
          %s1983 = int_to_ptr.hbm [resolvable:$true] %s1982
          %1988 = dma.vmem_to_hbm [thread:$0]  %s1981, 512, %s1983, %s1960, 64, 64, 4
        $region52: #{tpu_custom_call.1} parent=47 // pred_fallthru
          _
        // Predicated region
        $region53: #{tpu_custom_call.1} parent=47 // pred_check
          %p1989 = pneg %p281
        $region54: #{tpu_custom_call.1} parent=47 // pred_check_branch
          %1991 = sbr.rel (%p1989) target = $region56
        $region55: #{tpu_custom_call.1} parent=47 // pred_region
          %s1992 = smul.u32 8, %s32
          %1994 = vsyncadd %s1965, 0
          %s1995 = sadd.s32 %s33, %s1992
          %s1996 = smul.addr %s31, 8
          %s1997 = sadd.s32 %s1995, %s1996
          %s1998 = smul.addr %s1997, 4
          %s1999 = scalar_lea.hbm %s8, %s1998
          %s2000 = sshll.u32 %s1968, 4
          %s2001 = int_to_ptr.vmem [resolvable:$true] %s2000
          %s2002 = sshll.u32 %s1999, 4
          %s2003 = int_to_ptr.hbm [resolvable:$true] %s2002
          %2008 = dma.vmem_to_hbm [thread:$0]  %s2001, 512, %s2003, %s1965, 64, 64, 4
        $region56: #{tpu_custom_call.1} parent=47 // pred_fallthru
          _
      $region48: #{tpu_custom_call.1} parent=5 // pred_fallthru
        _
      %p2009 = scmp.le.s32.totalorder 2, %s21
      // Predicated region
      $region57: #{tpu_custom_call.1} parent=5 // pred_check
        %p2010 = pneg %p2009
      $region58: #{tpu_custom_call.1} parent=5 // pred_check_branch
        %2012 = sbr.rel (%p2010) target = $region60
      $region59: #{tpu_custom_call.1} parent=5 // pred_region
        %s2013 = ssub.s32 %s21, 2
        // Predicated region
        $region61: #{tpu_custom_call.1} parent=59 // pred_check
          %p2014 = pneg %p257
        $region62: #{tpu_custom_call.1} parent=59 // pred_check_branch
          %2016 = sbr.rel (%p2014) target = $region64
        $region63: #{tpu_custom_call.1} parent=59 // pred_region
          %s2017 = sand.u32 %s242, 1
          %s2018 = scalar_lea.sflag [#allocation3], %s2017
          %s2019 = sand.u32 %s242, 1
          %s2020 = smul.addr %s2019, 32
          %s2021 = scalar_lea.vmem [#allocation2], %s2020
          %2023 = dma.done %s2018, 512
        $region64: #{tpu_custom_call.1} parent=59 // pred_fallthru
          _
        // Predicated region
        $region65: #{tpu_custom_call.1} parent=59 // pred_check
          %p2024 = pneg %p287
        $region66: #{tpu_custom_call.1} parent=59 // pred_check_branch
          %2026 = sbr.rel (%p2024) target = $region68
        $region67: #{tpu_custom_call.1} parent=59 // pred_region
          %s2027 = sand.u32 %s272, 1
          %s2028 = scalar_lea.sflag [#allocation5], %s2027
          %s2029 = sand.u32 %s272, 1
          %s2030 = smul.addr %s2029, 32
          %s2031 = scalar_lea.vmem [#allocation4], %s2030
          %2033 = dma.done %s2028, 512
        $region68: #{tpu_custom_call.1} parent=59 // pred_fallthru
          _
      $region60: #{tpu_custom_call.1} parent=5 // pred_fallthru
        _
    $region6: #{tpu_custom_call.1} parent=1 // loop_footer
      %s25 = sadd.s32 1, %s21
    $region7: #{tpu_custom_call.1} parent=1 // loop_footer_branch
      %20 = sbr.rel target = $region3
    $region8: #{tpu_custom_call.1} parent=1 // loop_exit
      _
    %2034 = vsyncpa [#allocation3], 1
    %s2035 = scalar_lea.sflag [#allocation3], 1
    %2036 = vsyncpa %s2035, 1
    %2037 = vsyncpa [#allocation5], 1
    %s2038 = scalar_lea.sflag [#allocation5], 1
    %2039 = vsyncpa %s2038, 1

</llo_original>
